<compile_context>
chip_gen: v7x
topology: tpu7x:2x2x1
jax: 0.10.0
libtpu: 0.0.40
codegen_flags: <defaults>
</compile_context>

<pallas_src>
import jax
import jax.numpy as jnp
from jax.experimental import pallas as pl
from jax.experimental.pallas import tpu as pltpu

INPUT_DIM = 32
HIDDEN = 64
OUT_DIM = 2
BN_EPS = 1e-5


# ---------------------------------------------------------------------------
# Kernel: three fused Linear(+folded BN) stages with Tanh between them.
# ---------------------------------------------------------------------------
def decoder_kernel(x_ref, w1_ref, b1_ref, w2_ref, b2_ref, w3_ref, b3_ref, o_ref):
    x = x_ref[...]                      # (TN, 32)   compute dtype (f32 or bf16)
    w1 = w1_ref[...]
    w2 = w2_ref[...]
    w3 = w3_ref[...]

    # --- Linear1 (+ folded BN1) + Tanh ---  (bias / tanh in f32)
    h1 = jnp.dot(x, w1, preferred_element_type=jnp.float32) + b1_ref[...]
    h1 = jnp.tanh(h1)

    # --- Linear2 (+ folded BN2) + Tanh ---
    h2 = jnp.dot(h1.astype(w2.dtype), w2, preferred_element_type=jnp.float32) + b2_ref[...]
    h2 = jnp.tanh(h2)

    # --- Linear3 (128 -> 2) ---
    o_ref[...] = (
        jnp.dot(h2.astype(w3.dtype), w3, preferred_element_type=jnp.float32) + b3_ref[...]
    ).astype(o_ref.dtype)


# ---------------------------------------------------------------------------
# Wrapper: fold BN, cast operands, pad batch, build specs, call pallas_call.
# ---------------------------------------------------------------------------
def _round_up(a, m):
    return ((a + m - 1) // m) * m


def _fold_bn(w, b, gamma, beta, mean, var, eps=BN_EPS):
    """Fold eval-mode BatchNorm1d into the preceding Linear (w: (in,out))."""
    s = gamma * jax.lax.rsqrt(var + eps)          # (1, out)
    return w * s, (b - mean) * s + beta


def decoder_forward(x, params, *, tile_n=512, use_bf16=True):
    N, D = x.shape
    assert D == INPUT_DIM

    (w1, b1, g1, be1, m1, v1,
     w2, b2, g2, be2, m2, v2,
     w3, b3) = params

    # Fold BatchNorm into the Linear layers (eval-mode affine).
    w1f, b1f = _fold_bn(w1, b1, g1, be1, m1, v1)
    w2f, b2f = _fold_bn(w2, b2, g2, be2, m2, v2)
    w3f, b3f = w3, b3

    compute_dtype = jnp.bfloat16 if use_bf16 else jnp.float32
    xc = x.astype(compute_dtype)
    w1f = w1f.astype(compute_dtype)
    w2f = w2f.astype(compute_dtype)
    w3f = w3f.astype(compute_dtype)
    # Biases stay f32 (added after the f32 accumulation).
    b1f, b2f, b3f = b1f.astype(jnp.float32), b2f.astype(jnp.float32), b3f.astype(jnp.float32)

    # Explicit ragged-N contract: pad batch to a multiple of the tile,
    # slice the padding off afterwards.
    tile = min(tile_n, _round_up(N, 8))
    n_pad = _round_up(N, tile)
    if n_pad != N:
        xc = jnp.pad(xc, ((0, n_pad - N), (0, 0)))
    grid = (n_pad // tile,)

    def full_spec(shape):
        return pl.BlockSpec(shape, lambda i: tuple(0 for _ in shape))

    in_specs = [
        pl.BlockSpec((tile, INPUT_DIM), lambda i: (i, 0)),   # x tile
        full_spec(w1f.shape), full_spec(b1f.shape),
        full_spec(w2f.shape), full_spec(b2f.shape),
        full_spec(w3f.shape), full_spec(b3f.shape),
    ]
    out_spec = pl.BlockSpec((tile, OUT_DIM), lambda i: (i, 0))

    out = pl.pallas_call(
        decoder_kernel,
        out_shape=jax.ShapeDtypeStruct((n_pad, OUT_DIM), jnp.float32),
        grid=grid,
        in_specs=in_specs,
        out_specs=out_spec,
        compiler_params=pltpu.CompilerParams(
            dimension_semantics=("parallel",),
        ),
    )(xc, w1f, b1f, w2f, b2f, w3f, b3f)

    return out[:N]


# ---------------------------------------------------------------------------
# Parameter init (mimics PyTorch defaults) and pure-JAX reference.
# ---------------------------------------------------------------------------
def init_params(key, input_dim=INPUT_DIM, hidden=HIDDEN):
    keys = jax.random.split(key, 6)

    def linear(kw, kb, fan_in, fan_out):
        bound = 1.0 / jnp.sqrt(fan_in)
        # stored as (in, out) so kernel computes x @ W
        w = jax.random.uniform(kw, (fan_in, fan_out), jnp.float32, -bound, bound)
        b = jax.random.uniform(kb, (1, fan_out), jnp.float32, -bound, bound)
        return w, b

    w1, b1 = linear(keys[0], keys[1], input_dim, hidden)
    w2, b2 = linear(keys[2], keys[3], hidden, hidden * 2)
    w3, b3 = linear(keys[4], keys[5], hidden * 2, OUT_DIM)

    # BatchNorm1d params / running stats at PyTorch defaults.
    g1 = jnp.ones((1, hidden), jnp.float32)
    be1 = jnp.zeros((1, hidden), jnp.float32)
    m1 = jnp.zeros((1, hidden), jnp.float32)
    v1 = jnp.ones((1, hidden), jnp.float32)

    g2 = jnp.ones((1, hidden * 2), jnp.float32)
    be2 = jnp.zeros((1, hidden * 2), jnp.float32)
    m2 = jnp.zeros((1, hidden * 2), jnp.float32)
    v2 = jnp.ones((1, hidden * 2), jnp.float32)

    return (w1, b1, g1, be1, m1, v1,
            w2, b2, g2, be2, m2, v2,
            w3, b3)


def decoder_reference(x, params):
    """Pure-JAX reference (eval-mode forward, un-folded BN) for checking."""
    (w1, b1, g1, be1, m1, v1,
     w2, b2, g2, be2, m2, v2,
     w3, b3) = params
    h1 = x @ w1 + b1
    h1 = (h1 - m1) * g1 / jnp.sqrt(v1 + BN_EPS) + be1
    h1 = jnp.tanh(h1)
    h2 = h1 @ w2 + b2
    h2 = (h2 - m2) * g2 / jnp.sqrt(v2 + BN_EPS) + be2
    h2 = jnp.tanh(h2)
    return h2 @ w3 + b3


if __name__ == "__main__":
    key = jax.random.PRNGKey(0)
    k_x, k_p = jax.random.split(key)

    N = 1024  # 2 grid tiles of 512 -> both TensorCores busy on v7x
    x = jax.random.normal(k_x, (N, INPUT_DIM), jnp.float32)
    params = init_params(k_p)
    ref = decoder_reference(x, params)

    # Full-precision path: exact (ULP-level) match to the PyTorch semantics.
    out_f32 = decoder_forward(x, params, tile_n=512, use_bf16=False)
    out_f32 = jax.block_until_ready(out_f32)
    assert out_f32.shape == (N, OUT_DIM)
    assert jnp.allclose(out_f32, ref, atol=1e-4, rtol=1e-4), "f32 mismatch vs reference"

    # bf16-operand path (perf path for v6e/v7x): looser tolerance.
    out_bf16 = decoder_forward(x, params, tile_n=512, use_bf16=True)
    out_bf16 = jax.block_until_ready(out_bf16)
    assert out_bf16.shape == (N, OUT_DIM)
    assert jnp.allclose(out_bf16, ref, atol=5e-2, rtol=5e-2), "bf16 mismatch vs reference"

    print("KERNEL_OK")
</pallas_src>

<mosaic_0001>
module attributes {stable_mosaic.version = 11 : i64} {
  func.func @decoder_kernel(%arg0: i32, %arg1: memref<512x32xf32, #tpu.memory_space<vmem>>, %arg2: memref<32x64xf32, #tpu.memory_space<vmem>>, %arg3: memref<1x64xf32, #tpu.memory_space<vmem>>, %arg4: memref<64x128xf32, #tpu.memory_space<vmem>>, %arg5: memref<1x128xf32, #tpu.memory_space<vmem>>, %arg6: memref<128x2xf32, #tpu.memory_space<vmem>>, %arg7: memref<1x2xf32, #tpu.memory_space<vmem>>, %arg8: memref<512x2xf32, #tpu.memory_space<vmem>>) attributes {dimension_semantics = [#tpu.dimension_semantics<parallel>], iteration_bounds = array<i64: 2>, scalar_prefetch = 0 : i64, scratch_operands = 0 : i64, tpu.core_type = #tpu.core_type<tc>, window_params = [{transform_indices = @transform_0, window_bounds = array<i64: 512, 32>}, {pipeline_mode = #tpu.pipeline_mode<synchronous>, transform_indices = @transform_1, window_bounds = array<i64: 32, 64>}, {pipeline_mode = #tpu.pipeline_mode<synchronous>, transform_indices = @transform_2, window_bounds = array<i64: 1, 64>}, {pipeline_mode = #tpu.pipeline_mode<synchronous>, transform_indices = @transform_3, window_bounds = array<i64: 64, 128>}, {pipeline_mode = #tpu.pipeline_mode<synchronous>, transform_indices = @transform_4, window_bounds = array<i64: 1, 128>}, {pipeline_mode = #tpu.pipeline_mode<synchronous>, transform_indices = @transform_5, window_bounds = array<i64: 128, 2>}, {pipeline_mode = #tpu.pipeline_mode<synchronous>, transform_indices = @transform_6, window_bounds = array<i64: 1, 2>}, {transform_indices = @transform_7, window_bounds = array<i64: 512, 2>}]} {
    %c0 = arith.constant 0 : index
    %c0_0 = arith.constant 0 : index
    %0 = vector.load %arg1[%c0, %c0_0] : memref<512x32xf32, #tpu.memory_space<vmem>>, vector<512x32xf32>
    %c0_1 = arith.constant 0 : index
    %c0_2 = arith.constant 0 : index
    %1 = vector.load %arg2[%c0_1, %c0_2] : memref<32x64xf32, #tpu.memory_space<vmem>>, vector<32x64xf32>
    %c0_3 = arith.constant 0 : index
    %c0_4 = arith.constant 0 : index
    %2 = vector.load %arg4[%c0_3, %c0_4] : memref<64x128xf32, #tpu.memory_space<vmem>>, vector<64x128xf32>
    %c0_5 = arith.constant 0 : index
    %c0_6 = arith.constant 0 : index
    %3 = vector.load %arg6[%c0_5, %c0_6] : memref<128x2xf32, #tpu.memory_space<vmem>>, vector<128x2xf32>
    %cst = arith.constant dense<0.000000e+00> : vector<512x64xf32>
    %4 = tpu.matmul %0, %1, %cst {dimension_numbers = #tpu.dot_dimension_numbers<[1], [0], [0], [1], [0, 0, 1, 1], [], []>} : vector<512x32xf32>, vector<32x64xf32>, vector<512x64xf32> -> vector<512x64xf32>
    %c0_7 = arith.constant 0 : index
    %c0_8 = arith.constant 0 : index
    %5 = vector.load %arg3[%c0_7, %c0_8] : memref<1x64xf32, #tpu.memory_space<vmem>>, vector<1x64xf32>
    %6 = vector.broadcast %5 : vector<1x64xf32> to vector<512x64xf32>
    %7 = arith.addf %4, %6 : vector<512x64xf32>
    %8 = math.tanh %7 : vector<512x64xf32>
    %cst_9 = arith.constant dense<0.000000e+00> : vector<512x128xf32>
    %9 = tpu.matmul %8, %2, %cst_9 {dimension_numbers = #tpu.dot_dimension_numbers<[1], [0], [0], [1], [0, 0, 1, 1], [], []>} : vector<512x64xf32>, vector<64x128xf32>, vector<512x128xf32> -> vector<512x128xf32>
    %c0_10 = arith.constant 0 : index
    %c0_11 = arith.constant 0 : index
    %10 = vector.load %arg5[%c0_10, %c0_11] : memref<1x128xf32, #tpu.memory_space<vmem>>, vector<1x128xf32>
    %11 = vector.broadcast %10 : vector<1x128xf32> to vector<512x128xf32>
    %12 = arith.addf %9, %11 : vector<512x128xf32>
    %13 = math.tanh %12 : vector<512x128xf32>
    %cst_12 = arith.constant dense<0.000000e+00> : vector<512x2xf32>
    %14 = tpu.matmul %13, %3, %cst_12 {dimension_numbers = #tpu.dot_dimension_numbers<[1], [0], [0], [1], [0, 0, 1, 1], [], []>} : vector<512x128xf32>, vector<128x2xf32>, vector<512x2xf32> -> vector<512x2xf32>
    %c0_13 = arith.constant 0 : index
    %c0_14 = arith.constant 0 : index
    %15 = vector.load %arg7[%c0_13, %c0_14] : memref<1x2xf32, #tpu.memory_space<vmem>>, vector<1x2xf32>
    %16 = vector.broadcast %15 : vector<1x2xf32> to vector<512x2xf32>
    %17 = arith.addf %14, %16 : vector<512x2xf32>
    %c0_15 = arith.constant 0 : index
    %c0_16 = arith.constant 0 : index
    %18 = vector.load %arg8[%c0_15, %c0_16] : memref<512x2xf32, #tpu.memory_space<vmem>>, vector<512x2xf32>
    tpu.vector_store %arg8[%c0_15, %c0_16], %17 {strides = array<i32>} : memref<512x2xf32, #tpu.memory_space<vmem>>, vector<512x2xf32>,
    return
  }
  func.func @transform_0(%arg0: i32) -> (i32, i32) {
    %c0_i32 = arith.constant 0 : i32
    %c0_i32_0 = arith.constant 0 : i32
    return %arg0, %c0_i32 : i32, i32
  }
  func.func @transform_1(%arg0: i32) -> (i32, i32) {
    %c0_i32 = arith.constant 0 : i32
    %c0_i32_0 = arith.constant 0 : i32
    %c0_i32_1 = arith.constant 0 : i32
    return %c0_i32, %c0_i32_0 : i32, i32
  }
  func.func @transform_2(%arg0: i32) -> (i32, i32) {
    %c0_i32 = arith.constant 0 : i32
    %c0_i32_0 = arith.constant 0 : i32
    %c0_i32_1 = arith.constant 0 : i32
    return %c0_i32, %c0_i32_0 : i32, i32
  }
  func.func @transform_3(%arg0: i32) -> (i32, i32) {
    %c0_i32 = arith.constant 0 : i32
    %c0_i32_0 = arith.constant 0 : i32
    %c0_i32_1 = arith.constant 0 : i32
    return %c0_i32, %c0_i32_0 : i32, i32
  }
  func.func @transform_4(%arg0: i32) -> (i32, i32) {
    %c0_i32 = arith.constant 0 : i32
    %c0_i32_0 = arith.constant 0 : i32
    %c0_i32_1 = arith.constant 0 : i32
    return %c0_i32, %c0_i32_0 : i32, i32
  }
  func.func @transform_5(%arg0: i32) -> (i32, i32) {
    %c0_i32 = arith.constant 0 : i32
    %c0_i32_0 = arith.constant 0 : i32
    %c0_i32_1 = arith.constant 0 : i32
    return %c0_i32, %c0_i32_0 : i32, i32
  }
  func.func @transform_6(%arg0: i32) -> (i32, i32) {
    %c0_i32 = arith.constant 0 : i32
    %c0_i32_0 = arith.constant 0 : i32
    %c0_i32_1 = arith.constant 0 : i32
    return %c0_i32, %c0_i32_0 : i32, i32
  }
  func.func @transform_7(%arg0: i32) -> (i32, i32) {
    %c0_i32 = arith.constant 0 : i32
    %c0_i32_0 = arith.constant 0 : i32
    return %arg0, %c0_i32 : i32, i32
  }
}

</mosaic_0001>

<llo_original>
// kernel: tpu_custom_call.1
$region0: #{tpu_custom_call.1}
  #allocation0 [shape = 'u32[]', space=smem, size = 0x4, offset = 0x4, fixed_abs, tag = 'smem constant byte address 0x4 - core index']
  #allocation1 [shape = 'u32[144,128]{1,0:T(1,128)}', space=vmem, size = 0x12000, scoped, tag = 'internal scratch']
  %s0 = inlined_call_operand.vmem [shape: f32[1024,32], index: 0, kind: input, shape index: {}]
  %s1 = inlined_call_operand.vmem [shape: f32[32,64], index: 1, kind: input, shape index: {}]
  %s2 = inlined_call_operand.vmem [shape: f32[1,64], index: 2, kind: input, shape index: {}]
  %s3 = inlined_call_operand.vmem [shape: f32[64,128], index: 3, kind: input, shape index: {}]
  %s4 = inlined_call_operand.vmem [shape: f32[1,128], index: 4, kind: input, shape index: {}]
  %s5 = inlined_call_operand.vmem [shape: f32[128,2], index: 5, kind: input, shape index: {}]
  %s6 = inlined_call_operand.vmem [shape: f32[1,2], index: 6, kind: input, shape index: {}]
  %s7 = inlined_call_operand.vmem [shape: f32[1024,2], index: 7, kind: output, shape index: {}]
  %s8 = sld [smem:[#allocation0]]
  $region61: #{tpu_custom_call.1} parent=0
    _
  %s10 = ssub.s32 1, %s8
  %s11 = scalar_select 0, %s10, %s8
  loop: start=0, step=1, limit=4
  $region2: #{tpu_custom_call.1} parent=0 // loop_pre_header
    _
  $region3: #{tpu_custom_call.1} parent=0 // loop_header
    %s13 = sphi 0, %s17
    %p14 = scmp.ge.s32.totalorder %s13, 4
    %s23 = sphi 0, %s25
    %s26 = sphi 0, %s23
    %s27 = sphi 0, %s26
    %s43 = sphi 0, %s27
    %s47 = sphi 0, %s47
    %s49 = sphi 0, %s47
    %s50 = sphi 0, %s49
    %s64 = sphi 0, %s50
    %s68 = sphi 0, %s68
    %s70 = sphi 0, %s68
    %s71 = sphi 0, %s70
    %s85 = sphi 0, %s71
    %s89 = sphi 0, %s89
    %s91 = sphi 0, %s89
    %s92 = sphi 0, %s91
    %s106 = sphi 0, %s92
    %s110 = sphi 0, %s110
    %s112 = sphi 0, %s110
    %s113 = sphi 0, %s112
    %s127 = sphi 0, %s113
    %s131 = sphi 0, %s131
    %s133 = sphi 0, %s131
    %s134 = sphi 0, %s133
    %s148 = sphi 0, %s134
    %s152 = sphi 0, %s152
    %s154 = sphi 0, %s152
    %s155 = sphi 0, %s154
    %s169 = sphi 0, %s155
    %s175 = sphi 0, %s177
    %s178 = sphi 0, %s175
    %s179 = sphi 0, %s178
    %s195 = sphi 0, %s179
  $region4: #{tpu_custom_call.1} parent=0 // loop_header_branch
    %16 = sbr.rel (%p14) target = $region8
  $region5: #{tpu_custom_call.1} parent=0 // loop_body
    %s18 = ssub.s32 %s13, 1
    %s19 = ssub.s32 %s13, 2
    %s20 = sadd.s32 %s13, 1
    %s21 = ssub.s32 %s13, %s20
    %p22 = scmp.eq.s32.totalorder %s21, 0
    %s24 = sadd.s32 %s23, 1
    %s25 = scalar_select %p22, %s23, %s24
    %p28 = pneg %p22
    %p29 = scmp.eq.s32.totalorder %s13, 1
    %p30 = por %p28, %p29
    %p31 = scmp.ne.s32.totalorder %s23, %s26
    %p32 = scmp.eq.s32.totalorder %s13, 0
    %p33 = por %p31, %p32
    %p34 = scmp.ne.s32.totalorder %s23, %s26
    %p35 = scmp.eq.s32.totalorder %s18, 1
    %p36 = por %p34, %p35
    %p37 = scmp.ne.s32.totalorder %s26, %s27
    %p38 = scmp.eq.s32.totalorder %s18, 0
    %p39 = por %p37, %p38
    %p40 = scmp.ne.s32.totalorder %s26, %s27
    %p41 = scmp.eq.s32.totalorder %s19, 1
    %p42 = por %p40, %p41
    %p44 = scmp.ne.s32.totalorder %s27, %s43
    %p45 = scmp.eq.s32.totalorder %s19, 0
    %p46 = por %p44, %p45
    %s48 = sadd.s32 %s47, 1
    %p51 = scmp.eq.s32.totalorder %s13, 1
    %p52 = scmp.ne.s32.totalorder %s47, %s49
    %p53 = scmp.eq.s32.totalorder %s13, 0
    %p54 = por %p52, %p53
    %p55 = scmp.ne.s32.totalorder %s47, %s49
    %p56 = scmp.eq.s32.totalorder %s18, 1
    %p57 = por %p55, %p56
    %p58 = scmp.ne.s32.totalorder %s49, %s50
    %p59 = scmp.eq.s32.totalorder %s18, 0
    %p60 = por %p58, %p59
    %p61 = scmp.ne.s32.totalorder %s49, %s50
    %p62 = scmp.eq.s32.totalorder %s19, 1
    %p63 = por %p61, %p62
    %p65 = scmp.ne.s32.totalorder %s50, %s64
    %p66 = scmp.eq.s32.totalorder %s19, 0
    %p67 = por %p65, %p66
    %s69 = sadd.s32 %s68, 1
    %p72 = scmp.eq.s32.totalorder %s13, 1
    %p73 = scmp.ne.s32.totalorder %s68, %s70
    %p74 = scmp.eq.s32.totalorder %s13, 0
    %p75 = por %p73, %p74
    %p76 = scmp.ne.s32.totalorder %s68, %s70
    %p77 = scmp.eq.s32.totalorder %s18, 1
    %p78 = por %p76, %p77
    %p79 = scmp.ne.s32.totalorder %s70, %s71
    %p80 = scmp.eq.s32.totalorder %s18, 0
    %p81 = por %p79, %p80
    %p82 = scmp.ne.s32.totalorder %s70, %s71
    %p83 = scmp.eq.s32.totalorder %s19, 1
    %p84 = por %p82, %p83
    %p86 = scmp.ne.s32.totalorder %s71, %s85
    %p87 = scmp.eq.s32.totalorder %s19, 0
    %p88 = por %p86, %p87
    %s90 = sadd.s32 %s89, 1
    %p93 = scmp.eq.s32.totalorder %s13, 1
    %p94 = scmp.ne.s32.totalorder %s89, %s91
    %p95 = scmp.eq.s32.totalorder %s13, 0
    %p96 = por %p94, %p95
    %p97 = scmp.ne.s32.totalorder %s89, %s91
    %p98 = scmp.eq.s32.totalorder %s18, 1
    %p99 = por %p97, %p98
    %p100 = scmp.ne.s32.totalorder %s91, %s92
    %p101 = scmp.eq.s32.totalorder %s18, 0
    %p102 = por %p100, %p101
    %p103 = scmp.ne.s32.totalorder %s91, %s92
    %p104 = scmp.eq.s32.totalorder %s19, 1
    %p105 = por %p103, %p104
    %p107 = scmp.ne.s32.totalorder %s92, %s106
    %p108 = scmp.eq.s32.totalorder %s19, 0
    %p109 = por %p107, %p108
    %s111 = sadd.s32 %s110, 1
    %p114 = scmp.eq.s32.totalorder %s13, 1
    %p115 = scmp.ne.s32.totalorder %s110, %s112
    %p116 = scmp.eq.s32.totalorder %s13, 0
    %p117 = por %p115, %p116
    %p118 = scmp.ne.s32.totalorder %s110, %s112
    %p119 = scmp.eq.s32.totalorder %s18, 1
    %p120 = por %p118, %p119
    %p121 = scmp.ne.s32.totalorder %s112, %s113
    %p122 = scmp.eq.s32.totalorder %s18, 0
    %p123 = por %p121, %p122
    %p124 = scmp.ne.s32.totalorder %s112, %s113
    %p125 = scmp.eq.s32.totalorder %s19, 1
    %p126 = por %p124, %p125
    %p128 = scmp.ne.s32.totalorder %s113, %s127
    %p129 = scmp.eq.s32.totalorder %s19, 0
    %p130 = por %p128, %p129
    %s132 = sadd.s32 %s131, 1
    %p135 = scmp.eq.s32.totalorder %s13, 1
    %p136 = scmp.ne.s32.totalorder %s131, %s133
    %p137 = scmp.eq.s32.totalorder %s13, 0
    %p138 = por %p136, %p137
    %p139 = scmp.ne.s32.totalorder %s131, %s133
    %p140 = scmp.eq.s32.totalorder %s18, 1
    %p141 = por %p139, %p140
    %p142 = scmp.ne.s32.totalorder %s133, %s134
    %p143 = scmp.eq.s32.totalorder %s18, 0
    %p144 = por %p142, %p143
    %p145 = scmp.ne.s32.totalorder %s133, %s134
    %p146 = scmp.eq.s32.totalorder %s19, 1
    %p147 = por %p145, %p146
    %p149 = scmp.ne.s32.totalorder %s134, %s148
    %p150 = scmp.eq.s32.totalorder %s19, 0
    %p151 = por %p149, %p150
    %s153 = sadd.s32 %s152, 1
    %p156 = scmp.eq.s32.totalorder %s13, 1
    %p157 = scmp.ne.s32.totalorder %s152, %s154
    %p158 = scmp.eq.s32.totalorder %s13, 0
    %p159 = por %p157, %p158
    %p160 = scmp.ne.s32.totalorder %s152, %s154
    %p161 = scmp.eq.s32.totalorder %s18, 1
    %p162 = por %p160, %p161
    %p163 = scmp.ne.s32.totalorder %s154, %s155
    %p164 = scmp.eq.s32.totalorder %s18, 0
    %p165 = por %p163, %p164
    %p166 = scmp.ne.s32.totalorder %s154, %s155
    %p167 = scmp.eq.s32.totalorder %s19, 1
    %p168 = por %p166, %p167
    %p170 = scmp.ne.s32.totalorder %s155, %s169
    %p171 = scmp.eq.s32.totalorder %s19, 0
    %p172 = por %p170, %p171
    %s173 = ssub.s32 %s13, %s20
    %p174 = scmp.eq.s32.totalorder %s173, 0
    %s176 = sadd.s32 %s175, 1
    %s177 = scalar_select %p174, %s175, %s176
    %p180 = pneg %p174
    %p181 = scmp.eq.s32.totalorder %s13, 1
    %p182 = por %p180, %p181
    %p183 = scmp.ne.s32.totalorder %s175, %s178
    %p184 = scmp.eq.s32.totalorder %s13, 0
    %p185 = por %p183, %p184
    %p186 = scmp.ne.s32.totalorder %s175, %s178
    %p187 = scmp.eq.s32.totalorder %s18, 1
    %p188 = por %p186, %p187
    %p189 = scmp.ne.s32.totalorder %s178, %s179
    %p190 = scmp.eq.s32.totalorder %s18, 0
    %p191 = por %p189, %p190
    %p192 = scmp.ne.s32.totalorder %s178, %s179
    %p193 = scmp.eq.s32.totalorder %s19, 1
    %p194 = por %p192, %p193
    %p196 = scmp.ne.s32.totalorder %s179, %s195
    %p197 = scmp.eq.s32.totalorder %s19, 0
    %p198 = por %p196, %p197
    %p199 = scmp.le.s32.totalorder 1, %s13
    %p200 = scmp.lt.s32.totalorder %s13, 3
    %p201 = pnand %p199, %p200
    %p202 = pneg %p201
    // Predicated region
    $region9: #{tpu_custom_call.1} parent=5 // pred_check
      _
    $region10: #{tpu_custom_call.1} parent=5 // pred_check_branch
      %204 = sbr.rel (%p201) target = $region12
    $region11: #{tpu_custom_call.1} parent=5 // pred_region
      %s205 = ssub.s32 %s13, 1
      // Predicated region
      $region13: #{tpu_custom_call.1} parent=11 // pred_check
        %p206 = pneg %p60
      $region14: #{tpu_custom_call.1} parent=11 // pred_check_branch
        %208 = sbr.rel (%p206) target = $region16
      $region15: #{tpu_custom_call.1} parent=11 // pred_region
        _
      $region16: #{tpu_custom_call.1} parent=11 // pred_fallthru
        _
      // Predicated region
      $region17: #{tpu_custom_call.1} parent=11 // pred_check
        %p209 = pneg %p81
      $region18: #{tpu_custom_call.1} parent=11 // pred_check_branch
        %211 = sbr.rel (%p209) target = $region20
      $region19: #{tpu_custom_call.1} parent=11 // pred_region
        _
      $region20: #{tpu_custom_call.1} parent=11 // pred_fallthru
        _
      // Predicated region
      $region21: #{tpu_custom_call.1} parent=11 // pred_check
        %p212 = pneg %p102
      $region22: #{tpu_custom_call.1} parent=11 // pred_check_branch
        %214 = sbr.rel (%p212) target = $region24
      $region23: #{tpu_custom_call.1} parent=11 // pred_region
        _
      $region24: #{tpu_custom_call.1} parent=11 // pred_fallthru
        _
      // Predicated region
      $region25: #{tpu_custom_call.1} parent=11 // pred_check
        %p215 = pneg %p123
      $region26: #{tpu_custom_call.1} parent=11 // pred_check_branch
        %217 = sbr.rel (%p215) target = $region28
      $region27: #{tpu_custom_call.1} parent=11 // pred_region
        _
      $region28: #{tpu_custom_call.1} parent=11 // pred_fallthru
        _
      // Predicated region
      $region29: #{tpu_custom_call.1} parent=11 // pred_check
        %p218 = pneg %p144
      $region30: #{tpu_custom_call.1} parent=11 // pred_check_branch
        %220 = sbr.rel (%p218) target = $region32
      $region31: #{tpu_custom_call.1} parent=11 // pred_region
        _
      $region32: #{tpu_custom_call.1} parent=11 // pred_fallthru
        _
      // Predicated region
      $region33: #{tpu_custom_call.1} parent=11 // pred_check
        %p221 = pneg %p165
      $region34: #{tpu_custom_call.1} parent=11 // pred_check_branch
        %223 = sbr.rel (%p221) target = $region36
      $region35: #{tpu_custom_call.1} parent=11 // pred_region
        _
      $region36: #{tpu_custom_call.1} parent=11 // pred_fallthru
        _
    $region12: #{tpu_custom_call.1} parent=5 // pred_fallthru
      _
    %p224 = scmp.lt.s32.totalorder %s13, 2
    // Predicated region
    $region37: #{tpu_custom_call.1} parent=5 // pred_check
      %p225 = pneg %p224
    $region38: #{tpu_custom_call.1} parent=5 // pred_check_branch
      %227 = sbr.rel (%p225) target = $region40
    $region39: #{tpu_custom_call.1} parent=5 // pred_region
      // Predicated region
      $region41: #{tpu_custom_call.1} parent=39 // pred_check
        %p228 = pneg %p33
      $region42: #{tpu_custom_call.1} parent=39 // pred_check_branch
        %230 = sbr.rel (%p228) target = $region44
      $region43: #{tpu_custom_call.1} parent=39 // pred_region
        %s231 = smul.u32 64, %s13
        %p232 = scmp.lt.s32.totalorder %s231, 127
        %s233 = scalar_select %p232, %s231, 127
        %s234 = smul.addr %s233, 8
        %s235 = scalar_lea.vmem %s0, %s234
        %s236 = smul.u32 64, %s13
      $region44: #{tpu_custom_call.1} parent=39 // pred_fallthru
        _
    $region40: #{tpu_custom_call.1} parent=5 // pred_fallthru
      _
    %p237 = scmp.le.s32.totalorder 1, %s13
    %p238 = scmp.lt.s32.totalorder %s13, 3
    %p239 = pnand %p237, %p238
    %p240 = pneg %p239
    // Predicated region
    $region45: #{tpu_custom_call.1} parent=5 // pred_check
      _
    $region46: #{tpu_custom_call.1} parent=5 // pred_check_branch
      %242 = sbr.rel (%p239) target = $region48
    $region47: #{tpu_custom_call.1} parent=5 // pred_region
      %s243 = ssub.s32 %s13, 1
      %s244 = smul.u32 64, %s18
      %p245 = scmp.lt.s32.totalorder %s244, 127
      %s246 = scalar_select %p245, %s244, 127
      %s247 = smul.addr %s246, 8
      %s248 = scalar_lea.vmem %s0, %s247
      %p249 = pneg %p39
      %p250 = pneg %p36
      %p251 = pneg %p60
      %p252 = pneg %p57
      %p253 = pneg %p81
      %p254 = pneg %p78
      %p255 = pneg %p102
      %p256 = pneg %p99
      %p257 = pneg %p123
      %p258 = pneg %p120
      %p259 = pneg %p144
      %p260 = pneg %p141
      %p261 = pneg %p165
      %p262 = pneg %p162
      %p263 = pneg %p191
      %p264 = pneg %p188
      %s265 = smul.u32 64, %s18
      %p266 = scmp.lt.s32.totalorder %s265, 127
      %s267 = scalar_select %p266, %s265, 127
      %s268 = smul.addr %s267, 8
      %s269 = scalar_lea.vmem %s7, %s268
      %s270 = smul.u32 64, %s18
      %p271 = scmp.lt.s32.totalorder %s270, 127
      %s272 = scalar_select %p271, %s270, 127
      %s273 = smul.addr %s272, 8
      %s274 = scalar_lea.vmem %s0, %s273
      %s275 = smul.u32 64, %s18
      %s276 = smul.u32 64, %s18
      %p277 = scmp.lt.s32.totalorder %s276, 127
      %s278 = scalar_select %p277, %s276, 127
      %s279 = smul.addr %s278, 8
      %s280 = scalar_lea.vmem %s7, %s279
      %s281 = smul.u32 64, %s18
      %v282 = vld [vmem:[%s274] sm:$0xff]
      %v283 = vld [vmem:[%s274 + $0x8] sm:$0xff]
      %v284 = vld [vmem:[%s274 + $0x10] sm:$0xff]
      %v285 = vld [vmem:[%s274 + $0x18] sm:$0xff]
      %v286 = vld [vmem:[%s274 + $0x20] sm:$0xff]
      %v287 = vld [vmem:[%s274 + $0x28] sm:$0xff]
      %v288 = vld [vmem:[%s274 + $0x30] sm:$0xff]
      %v289 = vld [vmem:[%s274 + $0x38] sm:$0xff]
      %v290 = vld [vmem:[%s274 + $0x40] sm:$0xff]
      %v291 = vld [vmem:[%s274 + $0x48] sm:$0xff]
      %v292 = vld [vmem:[%s274 + $0x50] sm:$0xff]
      %v293 = vld [vmem:[%s274 + $0x58] sm:$0xff]
      %v294 = vld [vmem:[%s274 + $0x60] sm:$0xff]
      %v295 = vld [vmem:[%s274 + $0x68] sm:$0xff]
      %v296 = vld [vmem:[%s274 + $0x70] sm:$0xff]
      %v297 = vld [vmem:[%s274 + $0x78] sm:$0xff]
      %v298 = vld [vmem:[%s274 + $0x80] sm:$0xff]
      %v299 = vld [vmem:[%s274 + $0x88] sm:$0xff]
      %v300 = vld [vmem:[%s274 + $0x90] sm:$0xff]
      %v301 = vld [vmem:[%s274 + $0x98] sm:$0xff]
      %v302 = vld [vmem:[%s274 + $0xa0] sm:$0xff]
      %v303 = vld [vmem:[%s274 + $0xa8] sm:$0xff]
      %v304 = vld [vmem:[%s274 + $0xb0] sm:$0xff]
      %v305 = vld [vmem:[%s274 + $0xb8] sm:$0xff]
      %v306 = vld [vmem:[%s274 + $0xc0] sm:$0xff]
      %v307 = vld [vmem:[%s274 + $0xc8] sm:$0xff]
      %v308 = vld [vmem:[%s274 + $0xd0] sm:$0xff]
      %v309 = vld [vmem:[%s274 + $0xd8] sm:$0xff]
      %v310 = vld [vmem:[%s274 + $0xe0] sm:$0xff]
      %v311 = vld [vmem:[%s274 + $0xe8] sm:$0xff]
      %v312 = vld [vmem:[%s274 + $0xf0] sm:$0xff]
      %v313 = vld [vmem:[%s274 + $0xf8] sm:$0xff]
      %v314 = vld [vmem:[%s274 + $0x100] sm:$0xff]
      %v315 = vld [vmem:[%s274 + $0x108] sm:$0xff]
      %v316 = vld [vmem:[%s274 + $0x110] sm:$0xff]
      %v317 = vld [vmem:[%s274 + $0x118] sm:$0xff]
      %v318 = vld [vmem:[%s274 + $0x120] sm:$0xff]
      %v319 = vld [vmem:[%s274 + $0x128] sm:$0xff]
      %v320 = vld [vmem:[%s274 + $0x130] sm:$0xff]
      %v321 = vld [vmem:[%s274 + $0x138] sm:$0xff]
      %v322 = vld [vmem:[%s274 + $0x140] sm:$0xff]
      %v323 = vld [vmem:[%s274 + $0x148] sm:$0xff]
      %v324 = vld [vmem:[%s274 + $0x150] sm:$0xff]
      %v325 = vld [vmem:[%s274 + $0x158] sm:$0xff]
      %v326 = vld [vmem:[%s274 + $0x160] sm:$0xff]
      %v327 = vld [vmem:[%s274 + $0x168] sm:$0xff]
      %v328 = vld [vmem:[%s274 + $0x170] sm:$0xff]
      %v329 = vld [vmem:[%s274 + $0x178] sm:$0xff]
      %v330 = vld [vmem:[%s274 + $0x180] sm:$0xff]
      %v331 = vld [vmem:[%s274 + $0x188] sm:$0xff]
      %v332 = vld [vmem:[%s274 + $0x190] sm:$0xff]
      %v333 = vld [vmem:[%s274 + $0x198] sm:$0xff]
      %v334 = vld [vmem:[%s274 + $0x1a0] sm:$0xff]
      %v335 = vld [vmem:[%s274 + $0x1a8] sm:$0xff]
      %v336 = vld [vmem:[%s274 + $0x1b0] sm:$0xff]
      %v337 = vld [vmem:[%s274 + $0x1b8] sm:$0xff]
      %v338 = vld [vmem:[%s274 + $0x1c0] sm:$0xff]
      %v339 = vld [vmem:[%s274 + $0x1c8] sm:$0xff]
      %v340 = vld [vmem:[%s274 + $0x1d0] sm:$0xff]
      %v341 = vld [vmem:[%s274 + $0x1d8] sm:$0xff]
      %v342 = vld [vmem:[%s274 + $0x1e0] sm:$0xff]
      %v343 = vld [vmem:[%s274 + $0x1e8] sm:$0xff]
      %v344 = vld [vmem:[%s274 + $0x1f0] sm:$0xff]
      %v345 = vld [vmem:[%s274 + $0x1f8] sm:$0xff]
      %v346 = vld [vmem:[%s1] sm:$0xff]
      %v347 = vld [vmem:[%s1 + $0x8] sm:$0xff]
      %v348 = vld [vmem:[%s1 + $0x10] sm:$0xff]
      %v349 = vld [vmem:[%s1 + $0x18] sm:$0xff]
      %v350 = vld [vmem:[%s3] sm:$0xff]
      %v351 = vld [vmem:[%s3 + $0x8] sm:$0xff]
      %v352 = vld [vmem:[%s3 + $0x10] sm:$0xff]
      %v353 = vld [vmem:[%s3 + $0x18] sm:$0xff]
      %v354 = vld [vmem:[%s3 + $0x20] sm:$0xff]
      %v355 = vld [vmem:[%s3 + $0x28] sm:$0xff]
      %v356 = vld [vmem:[%s3 + $0x30] sm:$0xff]
      %v357 = vld [vmem:[%s3 + $0x38] sm:$0xff]
      %v358 = vld [vmem:[%s5] sm:$0xff]
      %v359 = vld [vmem:[%s5 + $0x8] sm:$0xff]
      %v360 = vld [vmem:[%s5 + $0x10] sm:$0xff]
      %v361 = vld [vmem:[%s5 + $0x18] sm:$0xff]
      %v362 = vld [vmem:[%s5 + $0x20] sm:$0xff]
      %v363 = vld [vmem:[%s5 + $0x28] sm:$0xff]
      %v364 = vld [vmem:[%s5 + $0x30] sm:$0xff]
      %v365 = vld [vmem:[%s5 + $0x38] sm:$0xff]
      %v366 = vld [vmem:[%s5 + $0x40] sm:$0xff]
      %v367 = vld [vmem:[%s5 + $0x48] sm:$0xff]
      %v368 = vld [vmem:[%s5 + $0x50] sm:$0xff]
      %v369 = vld [vmem:[%s5 + $0x58] sm:$0xff]
      %v370 = vld [vmem:[%s5 + $0x60] sm:$0xff]
      %v371 = vld [vmem:[%s5 + $0x68] sm:$0xff]
      %v372 = vld [vmem:[%s5 + $0x70] sm:$0xff]
      %v373 = vld [vmem:[%s5 + $0x78] sm:$0xff]
      %v374 = vld [vmem:[%s2] sm:$0x1]
      %v376 = vlaneseq
      %v377 = vshrl.u32 %v376, 7
      %v378 = vsub.s32 0, %v377
      %v379 = vrot.slane %v374, %v378
      %vm381 = vcmask 261120
      %v383 = vsel %vm381, %v282, 0
      %v386 = vsel %vm381, %v283, 0
      %v389 = vsel %vm381, %v284, 0
      %v392 = vsel %vm381, %v285, 0
      %v395 = vsel %vm381, %v286, 0
      %v398 = vsel %vm381, %v287, 0
      %v401 = vsel %vm381, %v288, 0
      %v404 = vsel %vm381, %v289, 0
      %v407 = vsel %vm381, %v290, 0
      %v410 = vsel %vm381, %v291, 0
      %v413 = vsel %vm381, %v292, 0
      %v416 = vsel %vm381, %v293, 0
      %v419 = vsel %vm381, %v294, 0
      %v422 = vsel %vm381, %v295, 0
      %v425 = vsel %vm381, %v296, 0
      %v428 = vsel %vm381, %v297, 0
      %v431 = vsel %vm381, %v298, 0
      %v434 = vsel %vm381, %v299, 0
      %v437 = vsel %vm381, %v300, 0
      %v440 = vsel %vm381, %v301, 0
      %v443 = vsel %vm381, %v302, 0
      %v446 = vsel %vm381, %v303, 0
      %v449 = vsel %vm381, %v304, 0
      %v452 = vsel %vm381, %v305, 0
      %v455 = vsel %vm381, %v306, 0
      %v458 = vsel %vm381, %v307, 0
      %v461 = vsel %vm381, %v308, 0
      %v464 = vsel %vm381, %v309, 0
      %v467 = vsel %vm381, %v310, 0
      %v470 = vsel %vm381, %v311, 0
      %v473 = vsel %vm381, %v312, 0
      %v476 = vsel %vm381, %v313, 0
      %v479 = vsel %vm381, %v314, 0
      %v482 = vsel %vm381, %v315, 0
      %v485 = vsel %vm381, %v316, 0
      %v488 = vsel %vm381, %v317, 0
      %v491 = vsel %vm381, %v318, 0
      %v494 = vsel %vm381, %v319, 0
      %v497 = vsel %vm381, %v320, 0
      %v500 = vsel %vm381, %v321, 0
      %v503 = vsel %vm381, %v322, 0
      %v506 = vsel %vm381, %v323, 0
      %v509 = vsel %vm381, %v324, 0
      %v512 = vsel %vm381, %v325, 0
      %v515 = vsel %vm381, %v326, 0
      %v518 = vsel %vm381, %v327, 0
      %v521 = vsel %vm381, %v328, 0
      %v524 = vsel %vm381, %v329, 0
      %v527 = vsel %vm381, %v330, 0
      %v530 = vsel %vm381, %v331, 0
      %v533 = vsel %vm381, %v332, 0
      %v536 = vsel %vm381, %v333, 0
      %v539 = vsel %vm381, %v334, 0
      %v542 = vsel %vm381, %v335, 0
      %v545 = vsel %vm381, %v336, 0
      %v548 = vsel %vm381, %v337, 0
      %v551 = vsel %vm381, %v338, 0
      %v554 = vsel %vm381, %v339, 0
      %v557 = vsel %vm381, %v340, 0
      %v560 = vsel %vm381, %v341, 0
      %v563 = vsel %vm381, %v342, 0
      %v566 = vsel %vm381, %v343, 0
      %v569 = vsel %vm381, %v344, 0
      %v572 = vsel %vm381, %v345, 0
      %574 = vmatprep.subr.mxu0 0.0
      %575 = vmatpush1.msra.mxu0 %v346
      %576 = vmatprep.subr.mxu0 0.0
      %577 = vmatpush1.msra.mxu0 %v347
      %578 = vmatprep.subr.mxu0 0.0
      %579 = vmatpush1.msra.mxu0 %v348
      %580 = vmatprep.subr.mxu0 0.0
      %581 = vmatpush1.msra.mxu0 %v349
      %582 = vmatprep.subr.mxu0 0.0
      %583 = vmatpush1.msra.mxu0 0.0
      %584 = vmatprep.subr.mxu0 0.0
      %585 = vmatpush1.msra.mxu0 0.0
      %586 = vmatprep.subr.mxu0 0.0
      %587 = vmatpush1.msra.mxu0 0.0
      %588 = vmatprep.subr.mxu0 0.0
      %589 = vmatpush1.msra.mxu0 0.0
      %590 = vmatprep.subr.mxu0 0.0
      %591 = vmatpush1.msra.mxu0 0.0
      %592 = vmatprep.subr.mxu0 0.0
      %593 = vmatpush1.msra.mxu0 0.0
      %594 = vmatprep.subr.mxu0 0.0
      %595 = vmatpush1.msra.mxu0 0.0
      %596 = vmatprep.subr.mxu0 0.0
      %597 = vmatpush1.msra.mxu0 0.0
      %598 = vmatprep.subr.mxu0 0.0
      %599 = vmatpush1.msra.mxu0 0.0
      %600 = vmatprep.subr.mxu0 0.0
      %601 = vmatpush1.msra.mxu0 0.0
      %602 = vmatprep.subr.mxu0 0.0
      %603 = vmatpush1.msra.mxu0 0.0
      %604 = vmatprep.subr.mxu0 0.0
      %605 = vmatpush1.msra.mxu0 0.0
      %606 = vmatprep.subr.mxu0 0.0
      %607 = vmatpush1.msra.mxu0 0.0
      %608 = vmatprep.subr.mxu0 0.0
      %609 = vmatpush1.msra.mxu0 0.0
      %610 = vmatprep.subr.mxu0 0.0
      %611 = vmatpush1.msra.mxu0 0.0
      %612 = vmatprep.subr.mxu0 0.0
      %613 = vmatpush1.msra.mxu0 0.0
      %614 = vmatprep.subr.mxu0 0.0
      %615 = vmatpush1.msra.mxu0 0.0
      %616 = vmatprep.subr.mxu0 0.0
      %617 = vmatpush1.msra.mxu0 0.0
      %618 = vmatprep.subr.mxu0 0.0
      %619 = vmatpush1.msra.mxu0 0.0
      %620 = vmatprep.subr.mxu0 0.0
      %621 = vmatpush1.msra.mxu0 0.0
      %622 = vmatprep.subr.mxu0 0.0
      %623 = vmatpush1.msra.mxu0 0.0
      %624 = vmatprep.subr.mxu0 0.0
      %625 = vmatpush1.msra.mxu0 0.0
      %626 = vmatprep.subr.mxu0 0.0
      %627 = vmatpush1.msra.mxu0 0.0
      %628 = vmatprep.subr.mxu0 0.0
      %629 = vmatpush1.msra.mxu0 0.0
      %630 = vmatprep.subr.mxu0 0.0
      %631 = vmatpush1.msra.mxu0 0.0
      %632 = vmatprep.subr.mxu0 0.0
      %633 = vmatpush1.msra.mxu0 0.0
      %634 = vmatprep.subr.mxu0 0.0
      %635 = vmatpush1.msra.mxu0 0.0
      %636 = vmatprep.subr.mxu0 0.0
      %637 = vmatpush1.msra.mxu0 0.0
      %638 = vmatprep.mubr.f32.mxu0 0.0
      %639 = vmatmul.mubr.f32.gmra.mrb[0].mxu0 %v383
      %v640 = vpop.f32.mrb[0].mxu0
      %v641 = vadd.f32 %v379, %v640
      %v642 = vpop.f32.mrb[0].mxu0
      %643 = vmatprep.mubr.f32.mxu0 0.0
      %644 = vmatmul.mubr.f32.gmra.mrb[0].mxu0 %v386
      %v645 = vpop.f32.mrb[0].mxu0
      %v646 = vadd.f32 %v379, %v645
      %v647 = vpop.f32.mrb[0].mxu0
      %648 = vmatprep.mubr.f32.mxu0 0.0
      %649 = vmatmul.mubr.f32.gmra.mrb[0].mxu0 %v389
      %v650 = vpop.f32.mrb[0].mxu0
      %v651 = vadd.f32 %v379, %v650
      %v652 = vpop.f32.mrb[0].mxu0
      %653 = vmatprep.mubr.f32.mxu0 0.0
      %654 = vmatmul.mubr.f32.gmra.mrb[0].mxu0 %v392
      %v655 = vpop.f32.mrb[0].mxu0
      %v656 = vadd.f32 %v379, %v655
      %v657 = vpop.f32.mrb[0].mxu0
      %658 = vmatprep.mubr.f32.mxu0 0.0
      %659 = vmatmul.mubr.f32.gmra.mrb[0].mxu0 %v395
      %v660 = vpop.f32.mrb[0].mxu0
      %v661 = vadd.f32 %v379, %v660
      %v662 = vpop.f32.mrb[0].mxu0
      %663 = vmatprep.mubr.f32.mxu0 0.0
      %664 = vmatmul.mubr.f32.gmra.mrb[0].mxu0 %v398
      %v665 = vpop.f32.mrb[0].mxu0
      %v666 = vadd.f32 %v379, %v665
      %v667 = vpop.f32.mrb[0].mxu0
      %668 = vmatprep.mubr.f32.mxu0 0.0
      %669 = vmatmul.mubr.f32.gmra.mrb[0].mxu0 %v401
      %v670 = vpop.f32.mrb[0].mxu0
      %v671 = vadd.f32 %v379, %v670
      %v672 = vpop.f32.mrb[0].mxu0
      %673 = vmatprep.mubr.f32.mxu0 0.0
      %674 = vmatmul.mubr.f32.gmra.mrb[0].mxu0 %v404
      %v675 = vpop.f32.mrb[0].mxu0
      %v676 = vadd.f32 %v379, %v675
      %v677 = vpop.f32.mrb[0].mxu0
      %678 = vmatprep.mubr.f32.mxu0 0.0
      %679 = vmatmul.mubr.f32.gmra.mrb[0].mxu0 %v407
      %v680 = vpop.f32.mrb[0].mxu0
      %v681 = vadd.f32 %v379, %v680
      %v682 = vpop.f32.mrb[0].mxu0
      %683 = vmatprep.mubr.f32.mxu0 0.0
      %684 = vmatmul.mubr.f32.gmra.mrb[0].mxu0 %v410
      %v685 = vpop.f32.mrb[0].mxu0
      %v686 = vadd.f32 %v379, %v685
      %v687 = vpop.f32.mrb[0].mxu0
      %688 = vmatprep.mubr.f32.mxu0 0.0
      %689 = vmatmul.mubr.f32.gmra.mrb[0].mxu0 %v413
      %v690 = vpop.f32.mrb[0].mxu0
      %v691 = vadd.f32 %v379, %v690
      %v692 = vpop.f32.mrb[0].mxu0
      %693 = vmatprep.mubr.f32.mxu0 0.0
      %694 = vmatmul.mubr.f32.gmra.mrb[0].mxu0 %v416
      %v695 = vpop.f32.mrb[0].mxu0
      %v696 = vadd.f32 %v379, %v695
      %v697 = vpop.f32.mrb[0].mxu0
      %698 = vmatprep.mubr.f32.mxu0 0.0
      %699 = vmatmul.mubr.f32.gmra.mrb[0].mxu0 %v419
      %v700 = vpop.f32.mrb[0].mxu0
      %v701 = vadd.f32 %v379, %v700
      %v702 = vpop.f32.mrb[0].mxu0
      %703 = vmatprep.mubr.f32.mxu0 0.0
      %704 = vmatmul.mubr.f32.gmra.mrb[0].mxu0 %v422
      %v705 = vpop.f32.mrb[0].mxu0
      %v706 = vadd.f32 %v379, %v705
      %v707 = vpop.f32.mrb[0].mxu0
      %708 = vmatprep.mubr.f32.mxu0 0.0
      %709 = vmatmul.mubr.f32.gmra.mrb[0].mxu0 %v425
      %v710 = vpop.f32.mrb[0].mxu0
      %v711 = vadd.f32 %v379, %v710
      %v712 = vpop.f32.mrb[0].mxu0
      %713 = vmatprep.mubr.f32.mxu0 0.0
      %714 = vmatmul.mubr.f32.gmra.mrb[0].mxu0 %v428
      %v715 = vpop.f32.mrb[0].mxu0
      %v716 = vadd.f32 %v379, %v715
      %v717 = vpop.f32.mrb[0].mxu0
      %718 = vmatprep.mubr.f32.mxu0 0.0
      %719 = vmatmul.mubr.f32.gmra.mrb[0].mxu0 %v431
      %v720 = vpop.f32.mrb[0].mxu0
      %v721 = vadd.f32 %v379, %v720
      %v722 = vpop.f32.mrb[0].mxu0
      %723 = vmatprep.mubr.f32.mxu0 0.0
      %724 = vmatmul.mubr.f32.gmra.mrb[0].mxu0 %v434
      %v725 = vpop.f32.mrb[0].mxu0
      %v726 = vadd.f32 %v379, %v725
      %v727 = vpop.f32.mrb[0].mxu0
      %728 = vmatprep.mubr.f32.mxu0 0.0
      %729 = vmatmul.mubr.f32.gmra.mrb[0].mxu0 %v437
      %v730 = vpop.f32.mrb[0].mxu0
      %v731 = vadd.f32 %v379, %v730
      %v732 = vpop.f32.mrb[0].mxu0
      %733 = vmatprep.mubr.f32.mxu0 0.0
      %734 = vmatmul.mubr.f32.gmra.mrb[0].mxu0 %v440
      %v735 = vpop.f32.mrb[0].mxu0
      %v736 = vadd.f32 %v379, %v735
      %v737 = vpop.f32.mrb[0].mxu0
      %738 = vmatprep.mubr.f32.mxu0 0.0
      %739 = vmatmul.mubr.f32.gmra.mrb[0].mxu0 %v443
      %v740 = vpop.f32.mrb[0].mxu0
      %v741 = vadd.f32 %v379, %v740
      %v742 = vpop.f32.mrb[0].mxu0
      %743 = vmatprep.mubr.f32.mxu0 0.0
      %744 = vmatmul.mubr.f32.gmra.mrb[0].mxu0 %v446
      %v745 = vpop.f32.mrb[0].mxu0
      %v746 = vadd.f32 %v379, %v745
      %v747 = vpop.f32.mrb[0].mxu0
      %748 = vmatprep.mubr.f32.mxu0 0.0
      %749 = vmatmul.mubr.f32.gmra.mrb[0].mxu0 %v449
      %v750 = vpop.f32.mrb[0].mxu0
      %v751 = vadd.f32 %v379, %v750
      %v752 = vpop.f32.mrb[0].mxu0
      %753 = vmatprep.mubr.f32.mxu0 0.0
      %754 = vmatmul.mubr.f32.gmra.mrb[0].mxu0 %v452
      %v755 = vpop.f32.mrb[0].mxu0
      %v756 = vadd.f32 %v379, %v755
      %v757 = vpop.f32.mrb[0].mxu0
      %758 = vmatprep.mubr.f32.mxu0 0.0
      %759 = vmatmul.mubr.f32.gmra.mrb[0].mxu0 %v455
      %v760 = vpop.f32.mrb[0].mxu0
      %v761 = vadd.f32 %v379, %v760
      %v762 = vpop.f32.mrb[0].mxu0
      %763 = vmatprep.mubr.f32.mxu0 0.0
      %764 = vmatmul.mubr.f32.gmra.mrb[0].mxu0 %v458
      %v765 = vpop.f32.mrb[0].mxu0
      %v766 = vadd.f32 %v379, %v765
      %v767 = vpop.f32.mrb[0].mxu0
      %768 = vmatprep.mubr.f32.mxu0 0.0
      %769 = vmatmul.mubr.f32.gmra.mrb[0].mxu0 %v461
      %v770 = vpop.f32.mrb[0].mxu0
      %v771 = vadd.f32 %v379, %v770
      %v772 = vpop.f32.mrb[0].mxu0
      %773 = vmatprep.mubr.f32.mxu0 0.0
      %774 = vmatmul.mubr.f32.gmra.mrb[0].mxu0 %v464
      %v775 = vpop.f32.mrb[0].mxu0
      %v776 = vadd.f32 %v379, %v775
      %v777 = vpop.f32.mrb[0].mxu0
      %778 = vmatprep.mubr.f32.mxu0 0.0
      %779 = vmatmul.mubr.f32.gmra.mrb[0].mxu0 %v467
      %v780 = vpop.f32.mrb[0].mxu0
      %v781 = vadd.f32 %v379, %v780
      %v782 = vpop.f32.mrb[0].mxu0
      %783 = vmatprep.mubr.f32.mxu0 0.0
      %784 = vmatmul.mubr.f32.gmra.mrb[0].mxu0 %v470
      %v785 = vpop.f32.mrb[0].mxu0
      %v786 = vadd.f32 %v379, %v785
      %v787 = vpop.f32.mrb[0].mxu0
      %788 = vmatprep.mubr.f32.mxu0 0.0
      %789 = vmatmul.mubr.f32.gmra.mrb[0].mxu0 %v473
      %v790 = vpop.f32.mrb[0].mxu0
      %v791 = vadd.f32 %v379, %v790
      %v792 = vpop.f32.mrb[0].mxu0
      %793 = vmatprep.mubr.f32.mxu0 0.0
      %794 = vmatmul.mubr.f32.gmra.mrb[0].mxu0 %v476
      %v795 = vpop.f32.mrb[0].mxu0
      %v796 = vadd.f32 %v379, %v795
      %v797 = vpop.f32.mrb[0].mxu0
      %798 = vmatprep.mubr.f32.mxu0 0.0
      %799 = vmatmul.mubr.f32.gmra.mrb[0].mxu0 %v479
      %v800 = vpop.f32.mrb[0].mxu0
      %v801 = vadd.f32 %v379, %v800
      %v802 = vpop.f32.mrb[0].mxu0
      %803 = vmatprep.mubr.f32.mxu0 0.0
      %804 = vmatmul.mubr.f32.gmra.mrb[0].mxu0 %v482
      %v805 = vpop.f32.mrb[0].mxu0
      %v806 = vadd.f32 %v379, %v805
      %v807 = vpop.f32.mrb[0].mxu0
      %808 = vmatprep.mubr.f32.mxu0 0.0
      %809 = vmatmul.mubr.f32.gmra.mrb[0].mxu0 %v485
      %v810 = vpop.f32.mrb[0].mxu0
      %v811 = vadd.f32 %v379, %v810
      %v812 = vpop.f32.mrb[0].mxu0
      %813 = vmatprep.mubr.f32.mxu0 0.0
      %814 = vmatmul.mubr.f32.gmra.mrb[0].mxu0 %v488
      %v815 = vpop.f32.mrb[0].mxu0
      %v816 = vadd.f32 %v379, %v815
      %v817 = vpop.f32.mrb[0].mxu0
      %818 = vmatprep.mubr.f32.mxu0 0.0
      %819 = vmatmul.mubr.f32.gmra.mrb[0].mxu0 %v491
      %v820 = vpop.f32.mrb[0].mxu0
      %v821 = vadd.f32 %v379, %v820
      %v822 = vpop.f32.mrb[0].mxu0
      %823 = vmatprep.mubr.f32.mxu0 0.0
      %824 = vmatmul.mubr.f32.gmra.mrb[0].mxu0 %v494
      %v825 = vpop.f32.mrb[0].mxu0
      %v826 = vadd.f32 %v379, %v825
      %v827 = vpop.f32.mrb[0].mxu0
      %828 = vmatprep.mubr.f32.mxu0 0.0
      %829 = vmatmul.mubr.f32.gmra.mrb[0].mxu0 %v497
      %v830 = vpop.f32.mrb[0].mxu0
      %v831 = vadd.f32 %v379, %v830
      %v832 = vpop.f32.mrb[0].mxu0
      %833 = vmatprep.mubr.f32.mxu0 0.0
      %834 = vmatmul.mubr.f32.gmra.mrb[0].mxu0 %v500
      %v835 = vpop.f32.mrb[0].mxu0
      %v836 = vadd.f32 %v379, %v835
      %v837 = vpop.f32.mrb[0].mxu0
      %838 = vmatprep.mubr.f32.mxu0 0.0
      %839 = vmatmul.mubr.f32.gmra.mrb[0].mxu0 %v503
      %v840 = vpop.f32.mrb[0].mxu0
      %v841 = vadd.f32 %v379, %v840
      %v842 = vpop.f32.mrb[0].mxu0
      %843 = vmatprep.mubr.f32.mxu0 0.0
      %844 = vmatmul.mubr.f32.gmra.mrb[0].mxu0 %v506
      %v845 = vpop.f32.mrb[0].mxu0
      %v846 = vadd.f32 %v379, %v845
      %v847 = vpop.f32.mrb[0].mxu0
      %848 = vmatprep.mubr.f32.mxu0 0.0
      %849 = vmatmul.mubr.f32.gmra.mrb[0].mxu0 %v509
      %v850 = vpop.f32.mrb[0].mxu0
      %v851 = vadd.f32 %v379, %v850
      %v852 = vpop.f32.mrb[0].mxu0
      %853 = vmatprep.mubr.f32.mxu0 0.0
      %854 = vmatmul.mubr.f32.gmra.mrb[0].mxu0 %v512
      %v855 = vpop.f32.mrb[0].mxu0
      %v856 = vadd.f32 %v379, %v855
      %v857 = vpop.f32.mrb[0].mxu0
      %858 = vmatprep.mubr.f32.mxu0 0.0
      %859 = vmatmul.mubr.f32.gmra.mrb[0].mxu0 %v515
      %v860 = vpop.f32.mrb[0].mxu0
      %v861 = vadd.f32 %v379, %v860
      %v862 = vpop.f32.mrb[0].mxu0
      %863 = vmatprep.mubr.f32.mxu0 0.0
      %864 = vmatmul.mubr.f32.gmra.mrb[0].mxu0 %v518
      %v865 = vpop.f32.mrb[0].mxu0
      %v866 = vadd.f32 %v379, %v865
      %v867 = vpop.f32.mrb[0].mxu0
      %868 = vmatprep.mubr.f32.mxu0 0.0
      %869 = vmatmul.mubr.f32.gmra.mrb[0].mxu0 %v521
      %v870 = vpop.f32.mrb[0].mxu0
      %v871 = vadd.f32 %v379, %v870
      %v872 = vpop.f32.mrb[0].mxu0
      %873 = vmatprep.mubr.f32.mxu0 0.0
      %874 = vmatmul.mubr.f32.gmra.mrb[0].mxu0 %v524
      %v875 = vpop.f32.mrb[0].mxu0
      %v876 = vadd.f32 %v379, %v875
      %v877 = vpop.f32.mrb[0].mxu0
      %878 = vmatprep.mubr.f32.mxu0 0.0
      %879 = vmatmul.mubr.f32.gmra.mrb[0].mxu0 %v527
      %v880 = vpop.f32.mrb[0].mxu0
      %v881 = vadd.f32 %v379, %v880
      %v882 = vpop.f32.mrb[0].mxu0
      %883 = vmatprep.mubr.f32.mxu0 0.0
      %884 = vmatmul.mubr.f32.gmra.mrb[0].mxu0 %v530
      %v885 = vpop.f32.mrb[0].mxu0
      %v886 = vadd.f32 %v379, %v885
      %v887 = vpop.f32.mrb[0].mxu0
      %888 = vmatprep.mubr.f32.mxu0 0.0
      %889 = vmatmul.mubr.f32.gmra.mrb[0].mxu0 %v533
      %v890 = vpop.f32.mrb[0].mxu0
      %v891 = vadd.f32 %v379, %v890
      %v892 = vpop.f32.mrb[0].mxu0
      %893 = vmatprep.mubr.f32.mxu0 0.0
      %894 = vmatmul.mubr.f32.gmra.mrb[0].mxu0 %v536
      %v895 = vpop.f32.mrb[0].mxu0
      %v896 = vadd.f32 %v379, %v895
      %v897 = vpop.f32.mrb[0].mxu0
      %898 = vmatprep.mubr.f32.mxu0 0.0
      %899 = vmatmul.mubr.f32.gmra.mrb[0].mxu0 %v539
      %v900 = vpop.f32.mrb[0].mxu0
      %v901 = vadd.f32 %v379, %v900
      %v902 = vpop.f32.mrb[0].mxu0
      %903 = vmatprep.mubr.f32.mxu0 0.0
      %904 = vmatmul.mubr.f32.gmra.mrb[0].mxu0 %v542
      %v905 = vpop.f32.mrb[0].mxu0
      %v906 = vadd.f32 %v379, %v905
      %v907 = vpop.f32.mrb[0].mxu0
      %908 = vmatprep.mubr.f32.mxu0 0.0
      %909 = vmatmul.mubr.f32.gmra.mrb[0].mxu0 %v545
      %v910 = vpop.f32.mrb[0].mxu0
      %v911 = vadd.f32 %v379, %v910
      %v912 = vpop.f32.mrb[0].mxu0
      %913 = vmatprep.mubr.f32.mxu0 0.0
      %914 = vmatmul.mubr.f32.gmra.mrb[0].mxu0 %v548
      %v915 = vpop.f32.mrb[0].mxu0
      %v916 = vadd.f32 %v379, %v915
      %v917 = vpop.f32.mrb[0].mxu0
      %918 = vmatprep.mubr.f32.mxu0 0.0
      %919 = vmatmul.mubr.f32.gmra.mrb[0].mxu0 %v551
      %v920 = vpop.f32.mrb[0].mxu0
      %v921 = vadd.f32 %v379, %v920
      %v922 = vpop.f32.mrb[0].mxu0
      %923 = vmatprep.mubr.f32.mxu0 0.0
      %924 = vmatmul.mubr.f32.gmra.mrb[0].mxu0 %v554
      %v925 = vpop.f32.mrb[0].mxu0
      %v926 = vadd.f32 %v379, %v925
      %v927 = vpop.f32.mrb[0].mxu0
      %928 = vmatprep.mubr.f32.mxu0 0.0
      %929 = vmatmul.mubr.f32.gmra.mrb[0].mxu0 %v557
      %v930 = vpop.f32.mrb[0].mxu0
      %v931 = vadd.f32 %v379, %v930
      %v932 = vpop.f32.mrb[0].mxu0
      %933 = vmatprep.mubr.f32.mxu0 0.0
      %934 = vmatmul.mubr.f32.gmra.mrb[0].mxu0 %v560
      %v935 = vpop.f32.mrb[0].mxu0
      %v936 = vadd.f32 %v379, %v935
      %v937 = vpop.f32.mrb[0].mxu0
      %938 = vmatprep.mubr.f32.mxu0 0.0
      %939 = vmatmul.mubr.f32.gmra.mrb[0].mxu0 %v563
      %v940 = vpop.f32.mrb[0].mxu0
      %v941 = vadd.f32 %v379, %v940
      %v942 = vpop.f32.mrb[0].mxu0
      %943 = vmatprep.mubr.f32.mxu0 0.0
      %944 = vmatmul.mubr.f32.gmra.mrb[0].mxu0 %v566
      %v945 = vpop.f32.mrb[0].mxu0
      %v946 = vadd.f32 %v379, %v945
      %v947 = vpop.f32.mrb[0].mxu0
      %948 = vmatprep.mubr.f32.mxu0 0.0
      %949 = vmatmul.mubr.f32.gmra.mrb[0].mxu0 %v569
      %v950 = vpop.f32.mrb[0].mxu0
      %v951 = vadd.f32 %v379, %v950
      %v952 = vpop.f32.mrb[0].mxu0
      %953 = vmatprep.mubr.f32.mxu0 0.0
      %954 = vmatmul.mubr.f32.gmra.mrb[0].mxu0 %v572
      %v955 = vpop.f32.mrb[0].mxu0
      %v956 = vadd.f32 %v379, %v955
      %v957 = vpop.f32.mrb[0].mxu0
      %958 = vdwg.mxu0
      %v959 = vtanh.pop %v641
      %v960 = vtanh.pop %v646
      %v961 = vtanh.pop %v651
      %v962 = vtanh.pop %v656
      %v963 = vtanh.pop %v661
      %v964 = vtanh.pop %v666
      %v965 = vtanh.pop %v671
      %v966 = vtanh.pop %v676
      %v967 = vtanh.pop %v681
      %v968 = vtanh.pop %v686
      %v969 = vtanh.pop %v691
      %v970 = vtanh.pop %v696
      %v971 = vtanh.pop %v701
      %v972 = vtanh.pop %v706
      %v973 = vtanh.pop %v711
      %v974 = vtanh.pop %v716
      %v975 = vtanh.pop %v721
      %v976 = vtanh.pop %v726
      %v977 = vtanh.pop %v731
      %v978 = vtanh.pop %v736
      %v979 = vtanh.pop %v741
      %v980 = vtanh.pop %v746
      %v981 = vtanh.pop %v751
      %v982 = vtanh.pop %v756
      %v983 = vtanh.pop %v761
      %v984 = vtanh.pop %v766
      %v985 = vtanh.pop %v771
      %v986 = vtanh.pop %v776
      %v987 = vtanh.pop %v781
      %v988 = vtanh.pop %v786
      %v989 = vtanh.pop %v791
      %v990 = vtanh.pop %v796
      %v991 = vtanh.pop %v801
      %v992 = vtanh.pop %v806
      %v993 = vtanh.pop %v811
      %v994 = vtanh.pop %v816
      %v995 = vtanh.pop %v821
      %v996 = vtanh.pop %v826
      %v997 = vtanh.pop %v831
      %v998 = vtanh.pop %v836
      %v999 = vtanh.pop %v841
      %v1000 = vtanh.pop %v846
      %v1001 = vtanh.pop %v851
      %v1002 = vtanh.pop %v856
      %v1003 = vtanh.pop %v861
      %v1004 = vtanh.pop %v866
      %v1005 = vtanh.pop %v871
      %v1006 = vtanh.pop %v876
      %v1007 = vtanh.pop %v881
      %v1008 = vtanh.pop %v886
      %v1009 = vtanh.pop %v891
      %v1010 = vtanh.pop %v896
      %v1011 = vtanh.pop %v901
      %v1012 = vtanh.pop %v906
      %v1013 = vtanh.pop %v911
      %v1014 = vtanh.pop %v916
      %v1015 = vtanh.pop %v921
      %v1016 = vtanh.pop %v926
      %v1017 = vtanh.pop %v931
      %v1018 = vtanh.pop %v936
      %v1019 = vtanh.pop %v941
      %v1020 = vtanh.pop %v946
      %v1021 = vtanh.pop %v951
      %v1022 = vtanh.pop %v956
      %v1023 = vld [vmem:[%s4] sm:$0x1]
      %v1025 = vlaneseq
      %v1026 = vshrl.u32 %v1025, 7
      %v1027 = vsub.s32 0, %v1026
      %v1028 = vrot.slane %v1023, %v1027
      %vm1030 = vcmask 523264
      %v1032 = vsel %vm1030, %v959, 0
      %v1035 = vsel %vm1030, %v960, 0
      %v1038 = vsel %vm1030, %v961, 0
      %v1041 = vsel %vm1030, %v962, 0
      %v1044 = vsel %vm1030, %v963, 0
      %v1047 = vsel %vm1030, %v964, 0
      %v1050 = vsel %vm1030, %v965, 0
      %v1053 = vsel %vm1030, %v966, 0
      %v1056 = vsel %vm1030, %v967, 0
      %v1059 = vsel %vm1030, %v968, 0
      %v1062 = vsel %vm1030, %v969, 0
      %v1065 = vsel %vm1030, %v970, 0
      %v1068 = vsel %vm1030, %v971, 0
      %v1071 = vsel %vm1030, %v972, 0
      %v1074 = vsel %vm1030, %v973, 0
      %v1077 = vsel %vm1030, %v974, 0
      %v1080 = vsel %vm1030, %v975, 0
      %v1083 = vsel %vm1030, %v976, 0
      %v1086 = vsel %vm1030, %v977, 0
      %v1089 = vsel %vm1030, %v978, 0
      %v1092 = vsel %vm1030, %v979, 0
      %v1095 = vsel %vm1030, %v980, 0
      %v1098 = vsel %vm1030, %v981, 0
      %v1101 = vsel %vm1030, %v982, 0
      %v1104 = vsel %vm1030, %v983, 0
      %v1107 = vsel %vm1030, %v984, 0
      %v1110 = vsel %vm1030, %v985, 0
      %v1113 = vsel %vm1030, %v986, 0
      %v1116 = vsel %vm1030, %v987, 0
      %v1119 = vsel %vm1030, %v988, 0
      %v1122 = vsel %vm1030, %v989, 0
      %v1125 = vsel %vm1030, %v990, 0
      %v1128 = vsel %vm1030, %v991, 0
      %v1131 = vsel %vm1030, %v992, 0
      %v1134 = vsel %vm1030, %v993, 0
      %v1137 = vsel %vm1030, %v994, 0
      %v1140 = vsel %vm1030, %v995, 0
      %v1143 = vsel %vm1030, %v996, 0
      %v1146 = vsel %vm1030, %v997, 0
      %v1149 = vsel %vm1030, %v998, 0
      %v1152 = vsel %vm1030, %v999, 0
      %v1155 = vsel %vm1030, %v1000, 0
      %v1158 = vsel %vm1030, %v1001, 0
      %v1161 = vsel %vm1030, %v1002, 0
      %v1164 = vsel %vm1030, %v1003, 0
      %v1167 = vsel %vm1030, %v1004, 0
      %v1170 = vsel %vm1030, %v1005, 0
      %v1173 = vsel %vm1030, %v1006, 0
      %v1176 = vsel %vm1030, %v1007, 0
      %v1179 = vsel %vm1030, %v1008, 0
      %v1182 = vsel %vm1030, %v1009, 0
      %v1185 = vsel %vm1030, %v1010, 0
      %v1188 = vsel %vm1030, %v1011, 0
      %v1191 = vsel %vm1030, %v1012, 0
      %v1194 = vsel %vm1030, %v1013, 0
      %v1197 = vsel %vm1030, %v1014, 0
      %v1200 = vsel %vm1030, %v1015, 0
      %v1203 = vsel %vm1030, %v1016, 0
      %v1206 = vsel %vm1030, %v1017, 0
      %v1209 = vsel %vm1030, %v1018, 0
      %v1212 = vsel %vm1030, %v1019, 0
      %v1215 = vsel %vm1030, %v1020, 0
      %v1218 = vsel %vm1030, %v1021, 0
      %v1221 = vsel %vm1030, %v1022, 0
      %1223 = vmatprep.subr.mxu0 0.0
      %1224 = vmatpush1.msra.mxu0 %v350
      %1225 = vmatprep.subr.mxu0 0.0
      %1226 = vmatpush1.msra.mxu0 %v351
      %1227 = vmatprep.subr.mxu0 0.0
      %1228 = vmatpush1.msra.mxu0 %v352
      %1229 = vmatprep.subr.mxu0 0.0
      %1230 = vmatpush1.msra.mxu0 %v353
      %1231 = vmatprep.subr.mxu0 0.0
      %1232 = vmatpush1.msra.mxu0 %v354
      %1233 = vmatprep.subr.mxu0 0.0
      %1234 = vmatpush1.msra.mxu0 %v355
      %1235 = vmatprep.subr.mxu0 0.0
      %1236 = vmatpush1.msra.mxu0 %v356
      %1237 = vmatprep.subr.mxu0 0.0
      %1238 = vmatpush1.msra.mxu0 %v357
      %1239 = vmatprep.subr.mxu0 0.0
      %1240 = vmatpush1.msra.mxu0 0.0
      %1241 = vmatprep.subr.mxu0 0.0
      %1242 = vmatpush1.msra.mxu0 0.0
      %1243 = vmatprep.subr.mxu0 0.0
      %1244 = vmatpush1.msra.mxu0 0.0
      %1245 = vmatprep.subr.mxu0 0.0
      %1246 = vmatpush1.msra.mxu0 0.0
      %1247 = vmatprep.subr.mxu0 0.0
      %1248 = vmatpush1.msra.mxu0 0.0
      %1249 = vmatprep.subr.mxu0 0.0
      %1250 = vmatpush1.msra.mxu0 0.0
      %1251 = vmatprep.subr.mxu0 0.0
      %1252 = vmatpush1.msra.mxu0 0.0
      %1253 = vmatprep.subr.mxu0 0.0
      %1254 = vmatpush1.msra.mxu0 0.0
      %1255 = vmatprep.subr.mxu0 0.0
      %1256 = vmatpush1.msra.mxu0 0.0
      %1257 = vmatprep.subr.mxu0 0.0
      %1258 = vmatpush1.msra.mxu0 0.0
      %1259 = vmatprep.subr.mxu0 0.0
      %1260 = vmatpush1.msra.mxu0 0.0
      %1261 = vmatprep.subr.mxu0 0.0
      %1262 = vmatpush1.msra.mxu0 0.0
      %1263 = vmatprep.subr.mxu0 0.0
      %1264 = vmatpush1.msra.mxu0 0.0
      %1265 = vmatprep.subr.mxu0 0.0
      %1266 = vmatpush1.msra.mxu0 0.0
      %1267 = vmatprep.subr.mxu0 0.0
      %1268 = vmatpush1.msra.mxu0 0.0
      %1269 = vmatprep.subr.mxu0 0.0
      %1270 = vmatpush1.msra.mxu0 0.0
      %1271 = vmatprep.subr.mxu0 0.0
      %1272 = vmatpush1.msra.mxu0 0.0
      %1273 = vmatprep.subr.mxu0 0.0
      %1274 = vmatpush1.msra.mxu0 0.0
      %1275 = vmatprep.subr.mxu0 0.0
      %1276 = vmatpush1.msra.mxu0 0.0
      %1277 = vmatprep.subr.mxu0 0.0
      %1278 = vmatpush1.msra.mxu0 0.0
      %1279 = vmatprep.subr.mxu0 0.0
      %1280 = vmatpush1.msra.mxu0 0.0
      %1281 = vmatprep.subr.mxu0 0.0
      %1282 = vmatpush1.msra.mxu0 0.0
      %1283 = vmatprep.subr.mxu0 0.0
      %1284 = vmatpush1.msra.mxu0 0.0
      %1285 = vmatprep.subr.mxu0 0.0
      %1286 = vmatpush1.msra.mxu0 0.0
      %1287 = vmatprep.mubr.f32.mxu0 0.0
      %1288 = vmatmul.mubr.f32.gmra.mrb[0].mxu0 %v1032
      %v1289 = vpop.f32.mrb[0].mxu0
      %v1290 = vadd.f32 %v1028, %v1289
      %v1291 = vpop.f32.mrb[0].mxu0
      %1292 = vmatprep.mubr.f32.mxu0 0.0
      %1293 = vmatmul.mubr.f32.gmra.mrb[0].mxu0 %v1035
      %v1294 = vpop.f32.mrb[0].mxu0
      %v1295 = vadd.f32 %v1028, %v1294
      %v1296 = vpop.f32.mrb[0].mxu0
      %1297 = vmatprep.mubr.f32.mxu0 0.0
      %1298 = vmatmul.mubr.f32.gmra.mrb[0].mxu0 %v1038
      %v1299 = vpop.f32.mrb[0].mxu0
      %v1300 = vadd.f32 %v1028, %v1299
      %v1301 = vpop.f32.mrb[0].mxu0
      %1302 = vmatprep.mubr.f32.mxu0 0.0
      %1303 = vmatmul.mubr.f32.gmra.mrb[0].mxu0 %v1041
      %v1304 = vpop.f32.mrb[0].mxu0
      %v1305 = vadd.f32 %v1028, %v1304
      %v1306 = vpop.f32.mrb[0].mxu0
      %1307 = vmatprep.mubr.f32.mxu0 0.0
      %1308 = vmatmul.mubr.f32.gmra.mrb[0].mxu0 %v1044
      %v1309 = vpop.f32.mrb[0].mxu0
      %v1310 = vadd.f32 %v1028, %v1309
      %v1311 = vpop.f32.mrb[0].mxu0
      %1312 = vmatprep.mubr.f32.mxu0 0.0
      %1313 = vmatmul.mubr.f32.gmra.mrb[0].mxu0 %v1047
      %v1314 = vpop.f32.mrb[0].mxu0
      %v1315 = vadd.f32 %v1028, %v1314
      %v1316 = vpop.f32.mrb[0].mxu0
      %1317 = vmatprep.mubr.f32.mxu0 0.0
      %1318 = vmatmul.mubr.f32.gmra.mrb[0].mxu0 %v1050
      %v1319 = vpop.f32.mrb[0].mxu0
      %v1320 = vadd.f32 %v1028, %v1319
      %v1321 = vpop.f32.mrb[0].mxu0
      %1322 = vmatprep.mubr.f32.mxu0 0.0
      %1323 = vmatmul.mubr.f32.gmra.mrb[0].mxu0 %v1053
      %v1324 = vpop.f32.mrb[0].mxu0
      %v1325 = vadd.f32 %v1028, %v1324
      %v1326 = vpop.f32.mrb[0].mxu0
      %1327 = vmatprep.mubr.f32.mxu0 0.0
      %1328 = vmatmul.mubr.f32.gmra.mrb[0].mxu0 %v1056
      %v1329 = vpop.f32.mrb[0].mxu0
      %v1330 = vadd.f32 %v1028, %v1329
      %v1331 = vpop.f32.mrb[0].mxu0
      %1332 = vmatprep.mubr.f32.mxu0 0.0
      %1333 = vmatmul.mubr.f32.gmra.mrb[0].mxu0 %v1059
      %v1334 = vpop.f32.mrb[0].mxu0
      %v1335 = vadd.f32 %v1028, %v1334
      %v1336 = vpop.f32.mrb[0].mxu0
      %1337 = vmatprep.mubr.f32.mxu0 0.0
      %1338 = vmatmul.mubr.f32.gmra.mrb[0].mxu0 %v1062
      %v1339 = vpop.f32.mrb[0].mxu0
      %v1340 = vadd.f32 %v1028, %v1339
      %v1341 = vpop.f32.mrb[0].mxu0
      %1342 = vmatprep.mubr.f32.mxu0 0.0
      %1343 = vmatmul.mubr.f32.gmra.mrb[0].mxu0 %v1065
      %v1344 = vpop.f32.mrb[0].mxu0
      %v1345 = vadd.f32 %v1028, %v1344
      %v1346 = vpop.f32.mrb[0].mxu0
      %1347 = vmatprep.mubr.f32.mxu0 0.0
      %1348 = vmatmul.mubr.f32.gmra.mrb[0].mxu0 %v1068
      %v1349 = vpop.f32.mrb[0].mxu0
      %v1350 = vadd.f32 %v1028, %v1349
      %v1351 = vpop.f32.mrb[0].mxu0
      %1352 = vmatprep.mubr.f32.mxu0 0.0
      %1353 = vmatmul.mubr.f32.gmra.mrb[0].mxu0 %v1071
      %v1354 = vpop.f32.mrb[0].mxu0
      %v1355 = vadd.f32 %v1028, %v1354
      %v1356 = vpop.f32.mrb[0].mxu0
      %1357 = vmatprep.mubr.f32.mxu0 0.0
      %1358 = vmatmul.mubr.f32.gmra.mrb[0].mxu0 %v1074
      %v1359 = vpop.f32.mrb[0].mxu0
      %v1360 = vadd.f32 %v1028, %v1359
      %v1361 = vpop.f32.mrb[0].mxu0
      %1362 = vmatprep.mubr.f32.mxu0 0.0
      %1363 = vmatmul.mubr.f32.gmra.mrb[0].mxu0 %v1077
      %v1364 = vpop.f32.mrb[0].mxu0
      %v1365 = vadd.f32 %v1028, %v1364
      %v1366 = vpop.f32.mrb[0].mxu0
      %1367 = vmatprep.mubr.f32.mxu0 0.0
      %1368 = vmatmul.mubr.f32.gmra.mrb[0].mxu0 %v1080
      %v1369 = vpop.f32.mrb[0].mxu0
      %v1370 = vadd.f32 %v1028, %v1369
      %v1371 = vpop.f32.mrb[0].mxu0
      %1372 = vmatprep.mubr.f32.mxu0 0.0
      %1373 = vmatmul.mubr.f32.gmra.mrb[0].mxu0 %v1083
      %v1374 = vpop.f32.mrb[0].mxu0
      %v1375 = vadd.f32 %v1028, %v1374
      %v1376 = vpop.f32.mrb[0].mxu0
      %1377 = vmatprep.mubr.f32.mxu0 0.0
      %1378 = vmatmul.mubr.f32.gmra.mrb[0].mxu0 %v1086
      %v1379 = vpop.f32.mrb[0].mxu0
      %v1380 = vadd.f32 %v1028, %v1379
      %v1381 = vpop.f32.mrb[0].mxu0
      %1382 = vmatprep.mubr.f32.mxu0 0.0
      %1383 = vmatmul.mubr.f32.gmra.mrb[0].mxu0 %v1089
      %v1384 = vpop.f32.mrb[0].mxu0
      %v1385 = vadd.f32 %v1028, %v1384
      %v1386 = vpop.f32.mrb[0].mxu0
      %1387 = vmatprep.mubr.f32.mxu0 0.0
      %1388 = vmatmul.mubr.f32.gmra.mrb[0].mxu0 %v1092
      %v1389 = vpop.f32.mrb[0].mxu0
      %v1390 = vadd.f32 %v1028, %v1389
      %v1391 = vpop.f32.mrb[0].mxu0
      %1392 = vmatprep.mubr.f32.mxu0 0.0
      %1393 = vmatmul.mubr.f32.gmra.mrb[0].mxu0 %v1095
      %v1394 = vpop.f32.mrb[0].mxu0
      %v1395 = vadd.f32 %v1028, %v1394
      %v1396 = vpop.f32.mrb[0].mxu0
      %1397 = vmatprep.mubr.f32.mxu0 0.0
      %1398 = vmatmul.mubr.f32.gmra.mrb[0].mxu0 %v1098
      %v1399 = vpop.f32.mrb[0].mxu0
      %v1400 = vadd.f32 %v1028, %v1399
      %v1401 = vpop.f32.mrb[0].mxu0
      %1402 = vmatprep.mubr.f32.mxu0 0.0
      %1403 = vmatmul.mubr.f32.gmra.mrb[0].mxu0 %v1101
      %v1404 = vpop.f32.mrb[0].mxu0
      %v1405 = vadd.f32 %v1028, %v1404
      %v1406 = vpop.f32.mrb[0].mxu0
      %1407 = vmatprep.mubr.f32.mxu0 0.0
      %1408 = vmatmul.mubr.f32.gmra.mrb[0].mxu0 %v1104
      %v1409 = vpop.f32.mrb[0].mxu0
      %v1410 = vadd.f32 %v1028, %v1409
      %v1411 = vpop.f32.mrb[0].mxu0
      %1412 = vmatprep.mubr.f32.mxu0 0.0
      %1413 = vmatmul.mubr.f32.gmra.mrb[0].mxu0 %v1107
      %v1414 = vpop.f32.mrb[0].mxu0
      %v1415 = vadd.f32 %v1028, %v1414
      %v1416 = vpop.f32.mrb[0].mxu0
      %1417 = vmatprep.mubr.f32.mxu0 0.0
      %1418 = vmatmul.mubr.f32.gmra.mrb[0].mxu0 %v1110
      %v1419 = vpop.f32.mrb[0].mxu0
      %v1420 = vadd.f32 %v1028, %v1419
      %v1421 = vpop.f32.mrb[0].mxu0
      %1422 = vmatprep.mubr.f32.mxu0 0.0
      %1423 = vmatmul.mubr.f32.gmra.mrb[0].mxu0 %v1113
      %v1424 = vpop.f32.mrb[0].mxu0
      %v1425 = vadd.f32 %v1028, %v1424
      %v1426 = vpop.f32.mrb[0].mxu0
      %1427 = vmatprep.mubr.f32.mxu0 0.0
      %1428 = vmatmul.mubr.f32.gmra.mrb[0].mxu0 %v1116
      %v1429 = vpop.f32.mrb[0].mxu0
      %v1430 = vadd.f32 %v1028, %v1429
      %v1431 = vpop.f32.mrb[0].mxu0
      %1432 = vmatprep.mubr.f32.mxu0 0.0
      %1433 = vmatmul.mubr.f32.gmra.mrb[0].mxu0 %v1119
      %v1434 = vpop.f32.mrb[0].mxu0
      %v1435 = vadd.f32 %v1028, %v1434
      %v1436 = vpop.f32.mrb[0].mxu0
      %1437 = vmatprep.mubr.f32.mxu0 0.0
      %1438 = vmatmul.mubr.f32.gmra.mrb[0].mxu0 %v1122
      %v1439 = vpop.f32.mrb[0].mxu0
      %v1440 = vadd.f32 %v1028, %v1439
      %v1441 = vpop.f32.mrb[0].mxu0
      %1442 = vmatprep.mubr.f32.mxu0 0.0
      %1443 = vmatmul.mubr.f32.gmra.mrb[0].mxu0 %v1125
      %v1444 = vpop.f32.mrb[0].mxu0
      %v1445 = vadd.f32 %v1028, %v1444
      %v1446 = vpop.f32.mrb[0].mxu0
      %1447 = vmatprep.mubr.f32.mxu0 0.0
      %1448 = vmatmul.mubr.f32.gmra.mrb[0].mxu0 %v1128
      %v1449 = vpop.f32.mrb[0].mxu0
      %v1450 = vadd.f32 %v1028, %v1449
      %v1451 = vpop.f32.mrb[0].mxu0
      %1452 = vmatprep.mubr.f32.mxu0 0.0
      %1453 = vmatmul.mubr.f32.gmra.mrb[0].mxu0 %v1131
      %v1454 = vpop.f32.mrb[0].mxu0
      %v1455 = vadd.f32 %v1028, %v1454
      %v1456 = vpop.f32.mrb[0].mxu0
      %1457 = vmatprep.mubr.f32.mxu0 0.0
      %1458 = vmatmul.mubr.f32.gmra.mrb[0].mxu0 %v1134
      %v1459 = vpop.f32.mrb[0].mxu0
      %v1460 = vadd.f32 %v1028, %v1459
      %v1461 = vpop.f32.mrb[0].mxu0
      %1462 = vmatprep.mubr.f32.mxu0 0.0
      %1463 = vmatmul.mubr.f32.gmra.mrb[0].mxu0 %v1137
      %v1464 = vpop.f32.mrb[0].mxu0
      %v1465 = vadd.f32 %v1028, %v1464
      %v1466 = vpop.f32.mrb[0].mxu0
      %1467 = vmatprep.mubr.f32.mxu0 0.0
      %1468 = vmatmul.mubr.f32.gmra.mrb[0].mxu0 %v1140
      %v1469 = vpop.f32.mrb[0].mxu0
      %v1470 = vadd.f32 %v1028, %v1469
      %v1471 = vpop.f32.mrb[0].mxu0
      %1472 = vmatprep.mubr.f32.mxu0 0.0
      %1473 = vmatmul.mubr.f32.gmra.mrb[0].mxu0 %v1143
      %v1474 = vpop.f32.mrb[0].mxu0
      %v1475 = vadd.f32 %v1028, %v1474
      %v1476 = vpop.f32.mrb[0].mxu0
      %1477 = vmatprep.mubr.f32.mxu0 0.0
      %1478 = vmatmul.mubr.f32.gmra.mrb[0].mxu0 %v1146
      %v1479 = vpop.f32.mrb[0].mxu0
      %v1480 = vadd.f32 %v1028, %v1479
      %v1481 = vpop.f32.mrb[0].mxu0
      %1482 = vmatprep.mubr.f32.mxu0 0.0
      %1483 = vmatmul.mubr.f32.gmra.mrb[0].mxu0 %v1149
      %v1484 = vpop.f32.mrb[0].mxu0
      %v1485 = vadd.f32 %v1028, %v1484
      %v1486 = vpop.f32.mrb[0].mxu0
      %1487 = vmatprep.mubr.f32.mxu0 0.0
      %1488 = vmatmul.mubr.f32.gmra.mrb[0].mxu0 %v1152
      %v1489 = vpop.f32.mrb[0].mxu0
      %v1490 = vadd.f32 %v1028, %v1489
      %v1491 = vpop.f32.mrb[0].mxu0
      %1492 = vmatprep.mubr.f32.mxu0 0.0
      %1493 = vmatmul.mubr.f32.gmra.mrb[0].mxu0 %v1155
      %v1494 = vpop.f32.mrb[0].mxu0
      %v1495 = vadd.f32 %v1028, %v1494
      %v1496 = vpop.f32.mrb[0].mxu0
      %1497 = vmatprep.mubr.f32.mxu0 0.0
      %1498 = vmatmul.mubr.f32.gmra.mrb[0].mxu0 %v1158
      %v1499 = vpop.f32.mrb[0].mxu0
      %v1500 = vadd.f32 %v1028, %v1499
      %v1501 = vpop.f32.mrb[0].mxu0
      %1502 = vmatprep.mubr.f32.mxu0 0.0
      %1503 = vmatmul.mubr.f32.gmra.mrb[0].mxu0 %v1161
      %v1504 = vpop.f32.mrb[0].mxu0
      %v1505 = vadd.f32 %v1028, %v1504
      %v1506 = vpop.f32.mrb[0].mxu0
      %1507 = vmatprep.mubr.f32.mxu0 0.0
      %1508 = vmatmul.mubr.f32.gmra.mrb[0].mxu0 %v1164
      %v1509 = vpop.f32.mrb[0].mxu0
      %v1510 = vadd.f32 %v1028, %v1509
      %v1511 = vpop.f32.mrb[0].mxu0
      %1512 = vmatprep.mubr.f32.mxu0 0.0
      %1513 = vmatmul.mubr.f32.gmra.mrb[0].mxu0 %v1167
      %v1514 = vpop.f32.mrb[0].mxu0
      %v1515 = vadd.f32 %v1028, %v1514
      %v1516 = vpop.f32.mrb[0].mxu0
      %1517 = vmatprep.mubr.f32.mxu0 0.0
      %1518 = vmatmul.mubr.f32.gmra.mrb[0].mxu0 %v1170
      %v1519 = vpop.f32.mrb[0].mxu0
      %v1520 = vadd.f32 %v1028, %v1519
      %v1521 = vpop.f32.mrb[0].mxu0
      %1522 = vmatprep.mubr.f32.mxu0 0.0
      %1523 = vmatmul.mubr.f32.gmra.mrb[0].mxu0 %v1173
      %v1524 = vpop.f32.mrb[0].mxu0
      %v1525 = vadd.f32 %v1028, %v1524
      %v1526 = vpop.f32.mrb[0].mxu0
      %1527 = vmatprep.mubr.f32.mxu0 0.0
      %1528 = vmatmul.mubr.f32.gmra.mrb[0].mxu0 %v1176
      %v1529 = vpop.f32.mrb[0].mxu0
      %v1530 = vadd.f32 %v1028, %v1529
      %v1531 = vpop.f32.mrb[0].mxu0
      %1532 = vmatprep.mubr.f32.mxu0 0.0
      %1533 = vmatmul.mubr.f32.gmra.mrb[0].mxu0 %v1179
      %v1534 = vpop.f32.mrb[0].mxu0
      %v1535 = vadd.f32 %v1028, %v1534
      %v1536 = vpop.f32.mrb[0].mxu0
      %1537 = vmatprep.mubr.f32.mxu0 0.0
      %1538 = vmatmul.mubr.f32.gmra.mrb[0].mxu0 %v1182
      %v1539 = vpop.f32.mrb[0].mxu0
      %v1540 = vadd.f32 %v1028, %v1539
      %v1541 = vpop.f32.mrb[0].mxu0
      %1542 = vmatprep.mubr.f32.mxu0 0.0
      %1543 = vmatmul.mubr.f32.gmra.mrb[0].mxu0 %v1185
      %v1544 = vpop.f32.mrb[0].mxu0
      %v1545 = vadd.f32 %v1028, %v1544
      %v1546 = vpop.f32.mrb[0].mxu0
      %1547 = vmatprep.mubr.f32.mxu0 0.0
      %1548 = vmatmul.mubr.f32.gmra.mrb[0].mxu0 %v1188
      %v1549 = vpop.f32.mrb[0].mxu0
      %v1550 = vadd.f32 %v1028, %v1549
      %v1551 = vpop.f32.mrb[0].mxu0
      %1552 = vmatprep.mubr.f32.mxu0 0.0
      %1553 = vmatmul.mubr.f32.gmra.mrb[0].mxu0 %v1191
      %v1554 = vpop.f32.mrb[0].mxu0
      %v1555 = vadd.f32 %v1028, %v1554
      %v1556 = vpop.f32.mrb[0].mxu0
      %1557 = vmatprep.mubr.f32.mxu0 0.0
      %1558 = vmatmul.mubr.f32.gmra.mrb[0].mxu0 %v1194
      %v1559 = vpop.f32.mrb[0].mxu0
      %v1560 = vadd.f32 %v1028, %v1559
      %v1561 = vpop.f32.mrb[0].mxu0
      %1562 = vmatprep.mubr.f32.mxu0 0.0
      %1563 = vmatmul.mubr.f32.gmra.mrb[0].mxu0 %v1197
      %v1564 = vpop.f32.mrb[0].mxu0
      %v1565 = vadd.f32 %v1028, %v1564
      %v1566 = vpop.f32.mrb[0].mxu0
      %1567 = vmatprep.mubr.f32.mxu0 0.0
      %1568 = vmatmul.mubr.f32.gmra.mrb[0].mxu0 %v1200
      %v1569 = vpop.f32.mrb[0].mxu0
      %v1570 = vadd.f32 %v1028, %v1569
      %v1571 = vpop.f32.mrb[0].mxu0
      %1572 = vmatprep.mubr.f32.mxu0 0.0
      %1573 = vmatmul.mubr.f32.gmra.mrb[0].mxu0 %v1203
      %v1574 = vpop.f32.mrb[0].mxu0
      %v1575 = vadd.f32 %v1028, %v1574
      %v1576 = vpop.f32.mrb[0].mxu0
      %1577 = vmatprep.mubr.f32.mxu0 0.0
      %1578 = vmatmul.mubr.f32.gmra.mrb[0].mxu0 %v1206
      %v1579 = vpop.f32.mrb[0].mxu0
      %v1580 = vadd.f32 %v1028, %v1579
      %v1581 = vpop.f32.mrb[0].mxu0
      %1582 = vmatprep.mubr.f32.mxu0 0.0
      %1583 = vmatmul.mubr.f32.gmra.mrb[0].mxu0 %v1209
      %v1584 = vpop.f32.mrb[0].mxu0
      %v1585 = vadd.f32 %v1028, %v1584
      %v1586 = vpop.f32.mrb[0].mxu0
      %1587 = vmatprep.mubr.f32.mxu0 0.0
      %1588 = vmatmul.mubr.f32.gmra.mrb[0].mxu0 %v1212
      %v1589 = vpop.f32.mrb[0].mxu0
      %v1590 = vadd.f32 %v1028, %v1589
      %v1591 = vpop.f32.mrb[0].mxu0
      %1592 = vmatprep.mubr.f32.mxu0 0.0
      %1593 = vmatmul.mubr.f32.gmra.mrb[0].mxu0 %v1215
      %v1594 = vpop.f32.mrb[0].mxu0
      %v1595 = vadd.f32 %v1028, %v1594
      %v1596 = vpop.f32.mrb[0].mxu0
      %1597 = vmatprep.mubr.f32.mxu0 0.0
      %1598 = vmatmul.mubr.f32.gmra.mrb[0].mxu0 %v1218
      %v1599 = vpop.f32.mrb[0].mxu0
      %v1600 = vadd.f32 %v1028, %v1599
      %v1601 = vpop.f32.mrb[0].mxu0
      %1602 = vmatprep.mubr.f32.mxu0 0.0
      %1603 = vmatmul.mubr.f32.gmra.mrb[0].mxu0 %v1221
      %v1604 = vpop.f32.mrb[0].mxu0
      %v1605 = vadd.f32 %v1028, %v1604
      %v1606 = vpop.f32.mrb[0].mxu0
      %1607 = vdwg.mxu0
      %v1608 = vtanh.pop %v1290
      %v1609 = vtanh.pop %v1295
      %v1610 = vtanh.pop %v1300
      %v1611 = vtanh.pop %v1305
      %v1612 = vtanh.pop %v1310
      %v1613 = vtanh.pop %v1315
      %v1614 = vtanh.pop %v1320
      %v1615 = vtanh.pop %v1325
      %v1616 = vtanh.pop %v1330
      %v1617 = vtanh.pop %v1335
      %v1618 = vtanh.pop %v1340
      %v1619 = vtanh.pop %v1345
      %v1620 = vtanh.pop %v1350
      %v1621 = vtanh.pop %v1355
      %v1622 = vtanh.pop %v1360
      %v1623 = vtanh.pop %v1365
      %v1624 = vtanh.pop %v1370
      %v1625 = vtanh.pop %v1375
      %v1626 = vtanh.pop %v1380
      %v1627 = vtanh.pop %v1385
      %v1628 = vtanh.pop %v1390
      %v1629 = vtanh.pop %v1395
      %v1630 = vtanh.pop %v1400
      %v1631 = vtanh.pop %v1405
      %v1632 = vtanh.pop %v1410
      %v1633 = vtanh.pop %v1415
      %v1634 = vtanh.pop %v1420
      %v1635 = vtanh.pop %v1425
      %v1636 = vtanh.pop %v1430
      %v1637 = vtanh.pop %v1435
      %v1638 = vtanh.pop %v1440
      %v1639 = vtanh.pop %v1445
      %v1640 = vtanh.pop %v1450
      %v1641 = vtanh.pop %v1455
      %v1642 = vtanh.pop %v1460
      %v1643 = vtanh.pop %v1465
      %v1644 = vtanh.pop %v1470
      %v1645 = vtanh.pop %v1475
      %v1646 = vtanh.pop %v1480
      %v1647 = vtanh.pop %v1485
      %v1648 = vtanh.pop %v1490
      %v1649 = vtanh.pop %v1495
      %v1650 = vtanh.pop %v1500
      %v1651 = vtanh.pop %v1505
      %v1652 = vtanh.pop %v1510
      %v1653 = vtanh.pop %v1515
      %v1654 = vtanh.pop %v1520
      %v1655 = vtanh.pop %v1525
      %v1656 = vtanh.pop %v1530
      %v1657 = vtanh.pop %v1535
      %v1658 = vtanh.pop %v1540
      %v1659 = vtanh.pop %v1545
      %v1660 = vtanh.pop %v1550
      %v1661 = vtanh.pop %v1555
      %v1662 = vtanh.pop %v1560
      %v1663 = vtanh.pop %v1565
      %v1664 = vtanh.pop %v1570
      %v1665 = vtanh.pop %v1575
      %v1666 = vtanh.pop %v1580
      %v1667 = vtanh.pop %v1585
      %v1668 = vtanh.pop %v1590
      %v1669 = vtanh.pop %v1595
      %v1670 = vtanh.pop %v1600
      %v1671 = vtanh.pop %v1605
      %v1672 = vld [vmem:[%s6] sm:$0x1]
      %v1674 = vlaneseq
      %v1675 = vshrl.u32 %v1674, 7
      %v1676 = vsub.s32 0, %v1675
      %v1677 = vrot.slane %v1672, %v1676
      %1679 = vmatprep.subr.mxu0 0.0
      %1680 = vmatpush1.msra.mxu0 %v358
      %1681 = vmatprep.subr.mxu0 0.0
      %1682 = vmatpush1.msra.mxu0 %v359
      %1683 = vmatprep.subr.mxu0 0.0
      %1684 = vmatpush1.msra.mxu0 %v360
      %1685 = vmatprep.subr.mxu0 0.0
      %1686 = vmatpush1.msra.mxu0 %v361
      %1687 = vmatprep.subr.mxu0 0.0
      %1688 = vmatpush1.msra.mxu0 %v362
      %1689 = vmatprep.subr.mxu0 0.0
      %1690 = vmatpush1.msra.mxu0 %v363
      %1691 = vmatprep.subr.mxu0 0.0
      %1692 = vmatpush1.msra.mxu0 %v364
      %1693 = vmatprep.subr.mxu0 0.0
      %1694 = vmatpush1.msra.mxu0 %v365
      %1695 = vmatprep.subr.mxu0 0.0
      %1696 = vmatpush1.msra.mxu0 %v366
      %1697 = vmatprep.subr.mxu0 0.0
      %1698 = vmatpush1.msra.mxu0 %v367
      %1699 = vmatprep.subr.mxu0 0.0
      %1700 = vmatpush1.msra.mxu0 %v368
      %1701 = vmatprep.subr.mxu0 0.0
      %1702 = vmatpush1.msra.mxu0 %v369
      %1703 = vmatprep.subr.mxu0 0.0
      %1704 = vmatpush1.msra.mxu0 %v370
      %1705 = vmatprep.subr.mxu0 0.0
      %1706 = vmatpush1.msra.mxu0 %v371
      %1707 = vmatprep.subr.mxu0 0.0
      %1708 = vmatpush1.msra.mxu0 %v372
      %1709 = vmatprep.subr.mxu0 0.0
      %1710 = vmatpush1.msra.mxu0 %v373
      %1711 = vmatprep.subr.mxu0 0.0
      %1712 = vmatpush1.msra.mxu0 0.0
      %1713 = vmatprep.subr.mxu0 0.0
      %1714 = vmatpush1.msra.mxu0 0.0
      %1715 = vmatprep.subr.mxu0 0.0
      %1716 = vmatpush1.msra.mxu0 0.0
      %1717 = vmatprep.subr.mxu0 0.0
      %1718 = vmatpush1.msra.mxu0 0.0
      %1719 = vmatprep.subr.mxu0 0.0
      %1720 = vmatpush1.msra.mxu0 0.0
      %1721 = vmatprep.subr.mxu0 0.0
      %1722 = vmatpush1.msra.mxu0 0.0
      %1723 = vmatprep.subr.mxu0 0.0
      %1724 = vmatpush1.msra.mxu0 0.0
      %1725 = vmatprep.subr.mxu0 0.0
      %1726 = vmatpush1.msra.mxu0 0.0
      %1727 = vmatprep.subr.mxu0 0.0
      %1728 = vmatpush1.msra.mxu0 0.0
      %1729 = vmatprep.subr.mxu0 0.0
      %1730 = vmatpush1.msra.mxu0 0.0
      %1731 = vmatprep.subr.mxu0 0.0
      %1732 = vmatpush1.msra.mxu0 0.0
      %1733 = vmatprep.subr.mxu0 0.0
      %1734 = vmatpush1.msra.mxu0 0.0
      %1735 = vmatprep.subr.mxu0 0.0
      %1736 = vmatpush1.msra.mxu0 0.0
      %1737 = vmatprep.subr.mxu0 0.0
      %1738 = vmatpush1.msra.mxu0 0.0
      %1739 = vmatprep.subr.mxu0 0.0
      %1740 = vmatpush1.msra.mxu0 0.0
      %1741 = vmatprep.subr.mxu0 0.0
      %1742 = vmatpush1.msra.mxu0 0.0
      %1743 = vmatprep.mubr.f32.mxu0 0.0
      %1744 = vmatmul.mubr.f32.gmra.mrb[0].mxu0 %v1608
      %v1745 = vpop.f32.mrb[0].mxu0
      %v1746 = vadd.f32 %v1677, %v1745
      %v1747 = vpop.f32.mrb[0].mxu0
      %1748 = vmatprep.mubr.f32.mxu0 0.0
      %1749 = vmatmul.mubr.f32.gmra.mrb[0].mxu0 %v1609
      %v1750 = vpop.f32.mrb[0].mxu0
      %v1751 = vadd.f32 %v1677, %v1750
      %v1752 = vpop.f32.mrb[0].mxu0
      %1753 = vmatprep.mubr.f32.mxu0 0.0
      %1754 = vmatmul.mubr.f32.gmra.mrb[0].mxu0 %v1610
      %v1755 = vpop.f32.mrb[0].mxu0
      %v1756 = vadd.f32 %v1677, %v1755
      %v1757 = vpop.f32.mrb[0].mxu0
      %1758 = vmatprep.mubr.f32.mxu0 0.0
      %1759 = vmatmul.mubr.f32.gmra.mrb[0].mxu0 %v1611
      %v1760 = vpop.f32.mrb[0].mxu0
      %v1761 = vadd.f32 %v1677, %v1760
      %v1762 = vpop.f32.mrb[0].mxu0
      %1763 = vmatprep.mubr.f32.mxu0 0.0
      %1764 = vmatmul.mubr.f32.gmra.mrb[0].mxu0 %v1612
      %v1765 = vpop.f32.mrb[0].mxu0
      %v1766 = vadd.f32 %v1677, %v1765
      %v1767 = vpop.f32.mrb[0].mxu0
      %1768 = vmatprep.mubr.f32.mxu0 0.0
      %1769 = vmatmul.mubr.f32.gmra.mrb[0].mxu0 %v1613
      %v1770 = vpop.f32.mrb[0].mxu0
      %v1771 = vadd.f32 %v1677, %v1770
      %v1772 = vpop.f32.mrb[0].mxu0
      %1773 = vmatprep.mubr.f32.mxu0 0.0
      %1774 = vmatmul.mubr.f32.gmra.mrb[0].mxu0 %v1614
      %v1775 = vpop.f32.mrb[0].mxu0
      %v1776 = vadd.f32 %v1677, %v1775
      %v1777 = vpop.f32.mrb[0].mxu0
      %1778 = vmatprep.mubr.f32.mxu0 0.0
      %1779 = vmatmul.mubr.f32.gmra.mrb[0].mxu0 %v1615
      %v1780 = vpop.f32.mrb[0].mxu0
      %v1781 = vadd.f32 %v1677, %v1780
      %v1782 = vpop.f32.mrb[0].mxu0
      %1783 = vmatprep.mubr.f32.mxu0 0.0
      %1784 = vmatmul.mubr.f32.gmra.mrb[0].mxu0 %v1616
      %v1785 = vpop.f32.mrb[0].mxu0
      %v1786 = vadd.f32 %v1677, %v1785
      %v1787 = vpop.f32.mrb[0].mxu0
      %1788 = vmatprep.mubr.f32.mxu0 0.0
      %1789 = vmatmul.mubr.f32.gmra.mrb[0].mxu0 %v1617
      %v1790 = vpop.f32.mrb[0].mxu0
      %v1791 = vadd.f32 %v1677, %v1790
      %v1792 = vpop.f32.mrb[0].mxu0
      %1793 = vmatprep.mubr.f32.mxu0 0.0
      %1794 = vmatmul.mubr.f32.gmra.mrb[0].mxu0 %v1618
      %v1795 = vpop.f32.mrb[0].mxu0
      %v1796 = vadd.f32 %v1677, %v1795
      %v1797 = vpop.f32.mrb[0].mxu0
      %1798 = vmatprep.mubr.f32.mxu0 0.0
      %1799 = vmatmul.mubr.f32.gmra.mrb[0].mxu0 %v1619
      %v1800 = vpop.f32.mrb[0].mxu0
      %v1801 = vadd.f32 %v1677, %v1800
      %v1802 = vpop.f32.mrb[0].mxu0
      %1803 = vmatprep.mubr.f32.mxu0 0.0
      %1804 = vmatmul.mubr.f32.gmra.mrb[0].mxu0 %v1620
      %v1805 = vpop.f32.mrb[0].mxu0
      %v1806 = vadd.f32 %v1677, %v1805
      %v1807 = vpop.f32.mrb[0].mxu0
      %1808 = vmatprep.mubr.f32.mxu0 0.0
      %1809 = vmatmul.mubr.f32.gmra.mrb[0].mxu0 %v1621
      %v1810 = vpop.f32.mrb[0].mxu0
      %v1811 = vadd.f32 %v1677, %v1810
      %v1812 = vpop.f32.mrb[0].mxu0
      %1813 = vmatprep.mubr.f32.mxu0 0.0
      %1814 = vmatmul.mubr.f32.gmra.mrb[0].mxu0 %v1622
      %v1815 = vpop.f32.mrb[0].mxu0
      %v1816 = vadd.f32 %v1677, %v1815
      %v1817 = vpop.f32.mrb[0].mxu0
      %1818 = vmatprep.mubr.f32.mxu0 0.0
      %1819 = vmatmul.mubr.f32.gmra.mrb[0].mxu0 %v1623
      %v1820 = vpop.f32.mrb[0].mxu0
      %v1821 = vadd.f32 %v1677, %v1820
      %v1822 = vpop.f32.mrb[0].mxu0
      %1823 = vmatprep.mubr.f32.mxu0 0.0
      %1824 = vmatmul.mubr.f32.gmra.mrb[0].mxu0 %v1624
      %v1825 = vpop.f32.mrb[0].mxu0
      %v1826 = vadd.f32 %v1677, %v1825
      %v1827 = vpop.f32.mrb[0].mxu0
      %1828 = vmatprep.mubr.f32.mxu0 0.0
      %1829 = vmatmul.mubr.f32.gmra.mrb[0].mxu0 %v1625
      %v1830 = vpop.f32.mrb[0].mxu0
      %v1831 = vadd.f32 %v1677, %v1830
      %v1832 = vpop.f32.mrb[0].mxu0
      %1833 = vmatprep.mubr.f32.mxu0 0.0
      %1834 = vmatmul.mubr.f32.gmra.mrb[0].mxu0 %v1626
      %v1835 = vpop.f32.mrb[0].mxu0
      %v1836 = vadd.f32 %v1677, %v1835
      %v1837 = vpop.f32.mrb[0].mxu0
      %1838 = vmatprep.mubr.f32.mxu0 0.0
      %1839 = vmatmul.mubr.f32.gmra.mrb[0].mxu0 %v1627
      %v1840 = vpop.f32.mrb[0].mxu0
      %v1841 = vadd.f32 %v1677, %v1840
      %v1842 = vpop.f32.mrb[0].mxu0
      %1843 = vmatprep.mubr.f32.mxu0 0.0
      %1844 = vmatmul.mubr.f32.gmra.mrb[0].mxu0 %v1628
      %v1845 = vpop.f32.mrb[0].mxu0
      %v1846 = vadd.f32 %v1677, %v1845
      %v1847 = vpop.f32.mrb[0].mxu0
      %1848 = vmatprep.mubr.f32.mxu0 0.0
      %1849 = vmatmul.mubr.f32.gmra.mrb[0].mxu0 %v1629
      %v1850 = vpop.f32.mrb[0].mxu0
      %v1851 = vadd.f32 %v1677, %v1850
      %v1852 = vpop.f32.mrb[0].mxu0
      %1853 = vmatprep.mubr.f32.mxu0 0.0
      %1854 = vmatmul.mubr.f32.gmra.mrb[0].mxu0 %v1630
      %v1855 = vpop.f32.mrb[0].mxu0
      %v1856 = vadd.f32 %v1677, %v1855
      %v1857 = vpop.f32.mrb[0].mxu0
      %1858 = vmatprep.mubr.f32.mxu0 0.0
      %1859 = vmatmul.mubr.f32.gmra.mrb[0].mxu0 %v1631
      %v1860 = vpop.f32.mrb[0].mxu0
      %v1861 = vadd.f32 %v1677, %v1860
      %v1862 = vpop.f32.mrb[0].mxu0
      %1863 = vmatprep.mubr.f32.mxu0 0.0
      %1864 = vmatmul.mubr.f32.gmra.mrb[0].mxu0 %v1632
      %v1865 = vpop.f32.mrb[0].mxu0
      %v1866 = vadd.f32 %v1677, %v1865
      %v1867 = vpop.f32.mrb[0].mxu0
      %1868 = vmatprep.mubr.f32.mxu0 0.0
      %1869 = vmatmul.mubr.f32.gmra.mrb[0].mxu0 %v1633
      %v1870 = vpop.f32.mrb[0].mxu0
      %v1871 = vadd.f32 %v1677, %v1870
      %v1872 = vpop.f32.mrb[0].mxu0
      %1873 = vmatprep.mubr.f32.mxu0 0.0
      %1874 = vmatmul.mubr.f32.gmra.mrb[0].mxu0 %v1634
      %v1875 = vpop.f32.mrb[0].mxu0
      %v1876 = vadd.f32 %v1677, %v1875
      %v1877 = vpop.f32.mrb[0].mxu0
      %1878 = vmatprep.mubr.f32.mxu0 0.0
      %1879 = vmatmul.mubr.f32.gmra.mrb[0].mxu0 %v1635
      %v1880 = vpop.f32.mrb[0].mxu0
      %v1881 = vadd.f32 %v1677, %v1880
      %v1882 = vpop.f32.mrb[0].mxu0
      %1883 = vmatprep.mubr.f32.mxu0 0.0
      %1884 = vmatmul.mubr.f32.gmra.mrb[0].mxu0 %v1636
      %v1885 = vpop.f32.mrb[0].mxu0
      %v1886 = vadd.f32 %v1677, %v1885
      %v1887 = vpop.f32.mrb[0].mxu0
      %1888 = vmatprep.mubr.f32.mxu0 0.0
      %1889 = vmatmul.mubr.f32.gmra.mrb[0].mxu0 %v1637
      %v1890 = vpop.f32.mrb[0].mxu0
      %v1891 = vadd.f32 %v1677, %v1890
      %v1892 = vpop.f32.mrb[0].mxu0
      %1893 = vmatprep.mubr.f32.mxu0 0.0
      %1894 = vmatmul.mubr.f32.gmra.mrb[0].mxu0 %v1638
      %v1895 = vpop.f32.mrb[0].mxu0
      %v1896 = vadd.f32 %v1677, %v1895
      %v1897 = vpop.f32.mrb[0].mxu0
      %1898 = vmatprep.mubr.f32.mxu0 0.0
      %1899 = vmatmul.mubr.f32.gmra.mrb[0].mxu0 %v1639
      %v1900 = vpop.f32.mrb[0].mxu0
      %v1901 = vadd.f32 %v1677, %v1900
      %v1902 = vpop.f32.mrb[0].mxu0
      %1903 = vmatprep.mubr.f32.mxu0 0.0
      %1904 = vmatmul.mubr.f32.gmra.mrb[0].mxu0 %v1640
      %v1905 = vpop.f32.mrb[0].mxu0
      %v1906 = vadd.f32 %v1677, %v1905
      %v1907 = vpop.f32.mrb[0].mxu0
      %1908 = vmatprep.mubr.f32.mxu0 0.0
      %1909 = vmatmul.mubr.f32.gmra.mrb[0].mxu0 %v1641
      %v1910 = vpop.f32.mrb[0].mxu0
      %v1911 = vadd.f32 %v1677, %v1910
      %v1912 = vpop.f32.mrb[0].mxu0
      %1913 = vmatprep.mubr.f32.mxu0 0.0
      %1914 = vmatmul.mubr.f32.gmra.mrb[0].mxu0 %v1642
      %v1915 = vpop.f32.mrb[0].mxu0
      %v1916 = vadd.f32 %v1677, %v1915
      %v1917 = vpop.f32.mrb[0].mxu0
      %1918 = vmatprep.mubr.f32.mxu0 0.0
      %1919 = vmatmul.mubr.f32.gmra.mrb[0].mxu0 %v1643
      %v1920 = vpop.f32.mrb[0].mxu0
      %v1921 = vadd.f32 %v1677, %v1920
      %v1922 = vpop.f32.mrb[0].mxu0
      %1923 = vmatprep.mubr.f32.mxu0 0.0
      %1924 = vmatmul.mubr.f32.gmra.mrb[0].mxu0 %v1644
      %v1925 = vpop.f32.mrb[0].mxu0
      %v1926 = vadd.f32 %v1677, %v1925
      %v1927 = vpop.f32.mrb[0].mxu0
      %1928 = vmatprep.mubr.f32.mxu0 0.0
      %1929 = vmatmul.mubr.f32.gmra.mrb[0].mxu0 %v1645
      %v1930 = vpop.f32.mrb[0].mxu0
      %v1931 = vadd.f32 %v1677, %v1930
      %v1932 = vpop.f32.mrb[0].mxu0
      %1933 = vmatprep.mubr.f32.mxu0 0.0
      %1934 = vmatmul.mubr.f32.gmra.mrb[0].mxu0 %v1646
      %v1935 = vpop.f32.mrb[0].mxu0
      %v1936 = vadd.f32 %v1677, %v1935
      %v1937 = vpop.f32.mrb[0].mxu0
      %1938 = vmatprep.mubr.f32.mxu0 0.0
      %1939 = vmatmul.mubr.f32.gmra.mrb[0].mxu0 %v1647
      %v1940 = vpop.f32.mrb[0].mxu0
      %v1941 = vadd.f32 %v1677, %v1940
      %v1942 = vpop.f32.mrb[0].mxu0
      %1943 = vmatprep.mubr.f32.mxu0 0.0
      %1944 = vmatmul.mubr.f32.gmra.mrb[0].mxu0 %v1648
      %v1945 = vpop.f32.mrb[0].mxu0
      %v1946 = vadd.f32 %v1677, %v1945
      %v1947 = vpop.f32.mrb[0].mxu0
      %1948 = vmatprep.mubr.f32.mxu0 0.0
      %1949 = vmatmul.mubr.f32.gmra.mrb[0].mxu0 %v1649
      %v1950 = vpop.f32.mrb[0].mxu0
      %v1951 = vadd.f32 %v1677, %v1950
      %v1952 = vpop.f32.mrb[0].mxu0
      %1953 = vmatprep.mubr.f32.mxu0 0.0
      %1954 = vmatmul.mubr.f32.gmra.mrb[0].mxu0 %v1650
      %v1955 = vpop.f32.mrb[0].mxu0
      %v1956 = vadd.f32 %v1677, %v1955
      %v1957 = vpop.f32.mrb[0].mxu0
      %1958 = vmatprep.mubr.f32.mxu0 0.0
      %1959 = vmatmul.mubr.f32.gmra.mrb[0].mxu0 %v1651
      %v1960 = vpop.f32.mrb[0].mxu0
      %v1961 = vadd.f32 %v1677, %v1960
      %v1962 = vpop.f32.mrb[0].mxu0
      %1963 = vmatprep.mubr.f32.mxu0 0.0
      %1964 = vmatmul.mubr.f32.gmra.mrb[0].mxu0 %v1652
      %v1965 = vpop.f32.mrb[0].mxu0
      %v1966 = vadd.f32 %v1677, %v1965
      %v1967 = vpop.f32.mrb[0].mxu0
      %1968 = vmatprep.mubr.f32.mxu0 0.0
      %1969 = vmatmul.mubr.f32.gmra.mrb[0].mxu0 %v1653
      %v1970 = vpop.f32.mrb[0].mxu0
      %v1971 = vadd.f32 %v1677, %v1970
      %v1972 = vpop.f32.mrb[0].mxu0
      %1973 = vmatprep.mubr.f32.mxu0 0.0
      %1974 = vmatmul.mubr.f32.gmra.mrb[0].mxu0 %v1654
      %v1975 = vpop.f32.mrb[0].mxu0
      %v1976 = vadd.f32 %v1677, %v1975
      %v1977 = vpop.f32.mrb[0].mxu0
      %1978 = vmatprep.mubr.f32.mxu0 0.0
      %1979 = vmatmul.mubr.f32.gmra.mrb[0].mxu0 %v1655
      %v1980 = vpop.f32.mrb[0].mxu0
      %v1981 = vadd.f32 %v1677, %v1980
      %v1982 = vpop.f32.mrb[0].mxu0
      %1983 = vmatprep.mubr.f32.mxu0 0.0
      %1984 = vmatmul.mubr.f32.gmra.mrb[0].mxu0 %v1656
      %v1985 = vpop.f32.mrb[0].mxu0
      %v1986 = vadd.f32 %v1677, %v1985
      %v1987 = vpop.f32.mrb[0].mxu0
      %1988 = vmatprep.mubr.f32.mxu0 0.0
      %1989 = vmatmul.mubr.f32.gmra.mrb[0].mxu0 %v1657
      %v1990 = vpop.f32.mrb[0].mxu0
      %v1991 = vadd.f32 %v1677, %v1990
      %v1992 = vpop.f32.mrb[0].mxu0
      %1993 = vmatprep.mubr.f32.mxu0 0.0
      %1994 = vmatmul.mubr.f32.gmra.mrb[0].mxu0 %v1658
      %v1995 = vpop.f32.mrb[0].mxu0
      %v1996 = vadd.f32 %v1677, %v1995
      %v1997 = vpop.f32.mrb[0].mxu0
      %1998 = vmatprep.mubr.f32.mxu0 0.0
      %1999 = vmatmul.mubr.f32.gmra.mrb[0].mxu0 %v1659
      %v2000 = vpop.f32.mrb[0].mxu0
      %v2001 = vadd.f32 %v1677, %v2000
      %v2002 = vpop.f32.mrb[0].mxu0
      %2003 = vmatprep.mubr.f32.mxu0 0.0
      %2004 = vmatmul.mubr.f32.gmra.mrb[0].mxu0 %v1660
      %v2005 = vpop.f32.mrb[0].mxu0
      %v2006 = vadd.f32 %v1677, %v2005
      %v2007 = vpop.f32.mrb[0].mxu0
      %2008 = vmatprep.mubr.f32.mxu0 0.0
      %2009 = vmatmul.mubr.f32.gmra.mrb[0].mxu0 %v1661
      %v2010 = vpop.f32.mrb[0].mxu0
      %v2011 = vadd.f32 %v1677, %v2010
      %v2012 = vpop.f32.mrb[0].mxu0
      %2013 = vmatprep.mubr.f32.mxu0 0.0
      %2014 = vmatmul.mubr.f32.gmra.mrb[0].mxu0 %v1662
      %v2015 = vpop.f32.mrb[0].mxu0
      %v2016 = vadd.f32 %v1677, %v2015
      %v2017 = vpop.f32.mrb[0].mxu0
      %2018 = vmatprep.mubr.f32.mxu0 0.0
      %2019 = vmatmul.mubr.f32.gmra.mrb[0].mxu0 %v1663
      %v2020 = vpop.f32.mrb[0].mxu0
      %v2021 = vadd.f32 %v1677, %v2020
      %v2022 = vpop.f32.mrb[0].mxu0
      %2023 = vmatprep.mubr.f32.mxu0 0.0
      %2024 = vmatmul.mubr.f32.gmra.mrb[0].mxu0 %v1664
      %v2025 = vpop.f32.mrb[0].mxu0
      %v2026 = vadd.f32 %v1677, %v2025
      %v2027 = vpop.f32.mrb[0].mxu0
      %2028 = vmatprep.mubr.f32.mxu0 0.0
      %2029 = vmatmul.mubr.f32.gmra.mrb[0].mxu0 %v1665
      %v2030 = vpop.f32.mrb[0].mxu0
      %v2031 = vadd.f32 %v1677, %v2030
      %v2032 = vpop.f32.mrb[0].mxu0
      %2033 = vmatprep.mubr.f32.mxu0 0.0
      %2034 = vmatmul.mubr.f32.gmra.mrb[0].mxu0 %v1666
      %v2035 = vpop.f32.mrb[0].mxu0
      %v2036 = vadd.f32 %v1677, %v2035
      %v2037 = vpop.f32.mrb[0].mxu0
      %2038 = vmatprep.mubr.f32.mxu0 0.0
      %2039 = vmatmul.mubr.f32.gmra.mrb[0].mxu0 %v1667
      %v2040 = vpop.f32.mrb[0].mxu0
      %v2041 = vadd.f32 %v1677, %v2040
      %v2042 = vpop.f32.mrb[0].mxu0
      %2043 = vmatprep.mubr.f32.mxu0 0.0
      %2044 = vmatmul.mubr.f32.gmra.mrb[0].mxu0 %v1668
      %v2045 = vpop.f32.mrb[0].mxu0
      %v2046 = vadd.f32 %v1677, %v2045
      %v2047 = vpop.f32.mrb[0].mxu0
      %2048 = vmatprep.mubr.f32.mxu0 0.0
      %2049 = vmatmul.mubr.f32.gmra.mrb[0].mxu0 %v1669
      %v2050 = vpop.f32.mrb[0].mxu0
      %v2051 = vadd.f32 %v1677, %v2050
      %v2052 = vpop.f32.mrb[0].mxu0
      %2053 = vmatprep.mubr.f32.mxu0 0.0
      %2054 = vmatmul.mubr.f32.gmra.mrb[0].mxu0 %v1670
      %v2055 = vpop.f32.mrb[0].mxu0
      %v2056 = vadd.f32 %v1677, %v2055
      %v2057 = vpop.f32.mrb[0].mxu0
      %2058 = vmatprep.mubr.f32.mxu0 0.0
      %2059 = vmatmul.mubr.f32.gmra.mrb[0].mxu0 %v1671
      %v2060 = vpop.f32.mrb[0].mxu0
      %v2061 = vadd.f32 %v1677, %v2060
      %v2062 = vpop.f32.mrb[0].mxu0
      %2063 = vdwg.mxu0
      %vm2064 = vcmask 15360
      %2065 = vst.msk [vmem:[%s280] sm:$0xff] %vm2064, %v1746
      %2066 = vst.msk [vmem:[%s280 + $0x8] sm:$0xff] %vm2064, %v1751
      %2067 = vst.msk [vmem:[%s280 + $0x10] sm:$0xff] %vm2064, %v1756
      %2068 = vst.msk [vmem:[%s280 + $0x18] sm:$0xff] %vm2064, %v1761
      %2069 = vst.msk [vmem:[%s280 + $0x20] sm:$0xff] %vm2064, %v1766
      %2070 = vst.msk [vmem:[%s280 + $0x28] sm:$0xff] %vm2064, %v1771
      %2071 = vst.msk [vmem:[%s280 + $0x30] sm:$0xff] %vm2064, %v1776
      %2072 = vst.msk [vmem:[%s280 + $0x38] sm:$0xff] %vm2064, %v1781
      %2073 = vst.msk [vmem:[%s280 + $0x40] sm:$0xff] %vm2064, %v1786
      %2074 = vst.msk [vmem:[%s280 + $0x48] sm:$0xff] %vm2064, %v1791
      %2075 = vst.msk [vmem:[%s280 + $0x50] sm:$0xff] %vm2064, %v1796
      %2076 = vst.msk [vmem:[%s280 + $0x58] sm:$0xff] %vm2064, %v1801
      %2077 = vst.msk [vmem:[%s280 + $0x60] sm:$0xff] %vm2064, %v1806
      %2078 = vst.msk [vmem:[%s280 + $0x68] sm:$0xff] %vm2064, %v1811
      %2079 = vst.msk [vmem:[%s280 + $0x70] sm:$0xff] %vm2064, %v1816
      %2080 = vst.msk [vmem:[%s280 + $0x78] sm:$0xff] %vm2064, %v1821
      %2081 = vst.msk [vmem:[%s280 + $0x80] sm:$0xff] %vm2064, %v1826
      %2082 = vst.msk [vmem:[%s280 + $0x88] sm:$0xff] %vm2064, %v1831
      %2083 = vst.msk [vmem:[%s280 + $0x90] sm:$0xff] %vm2064, %v1836
      %2084 = vst.msk [vmem:[%s280 + $0x98] sm:$0xff] %vm2064, %v1841
      %2085 = vst.msk [vmem:[%s280 + $0xa0] sm:$0xff] %vm2064, %v1846
      %2086 = vst.msk [vmem:[%s280 + $0xa8] sm:$0xff] %vm2064, %v1851
      %2087 = vst.msk [vmem:[%s280 + $0xb0] sm:$0xff] %vm2064, %v1856
      %2088 = vst.msk [vmem:[%s280 + $0xb8] sm:$0xff] %vm2064, %v1861
      %2089 = vst.msk [vmem:[%s280 + $0xc0] sm:$0xff] %vm2064, %v1866
      %2090 = vst.msk [vmem:[%s280 + $0xc8] sm:$0xff] %vm2064, %v1871
      %2091 = vst.msk [vmem:[%s280 + $0xd0] sm:$0xff] %vm2064, %v1876
      %2092 = vst.msk [vmem:[%s280 + $0xd8] sm:$0xff] %vm2064, %v1881
      %2093 = vst.msk [vmem:[%s280 + $0xe0] sm:$0xff] %vm2064, %v1886
      %2094 = vst.msk [vmem:[%s280 + $0xe8] sm:$0xff] %vm2064, %v1891
      %2095 = vst.msk [vmem:[%s280 + $0xf0] sm:$0xff] %vm2064, %v1896
      %2096 = vst.msk [vmem:[%s280 + $0xf8] sm:$0xff] %vm2064, %v1901
      %2097 = vst.msk [vmem:[%s280 + $0x100] sm:$0xff] %vm2064, %v1906
      %2098 = vst.msk [vmem:[%s280 + $0x108] sm:$0xff] %vm2064, %v1911
      %2099 = vst.msk [vmem:[%s280 + $0x110] sm:$0xff] %vm2064, %v1916
      %2100 = vst.msk [vmem:[%s280 + $0x118] sm:$0xff] %vm2064, %v1921
      %2101 = vst.msk [vmem:[%s280 + $0x120] sm:$0xff] %vm2064, %v1926
      %2102 = vst.msk [vmem:[%s280 + $0x128] sm:$0xff] %vm2064, %v1931
      %2103 = vst.msk [vmem:[%s280 + $0x130] sm:$0xff] %vm2064, %v1936
      %2104 = vst.msk [vmem:[%s280 + $0x138] sm:$0xff] %vm2064, %v1941
      %2105 = vst.msk [vmem:[%s280 + $0x140] sm:$0xff] %vm2064, %v1946
      %2106 = vst.msk [vmem:[%s280 + $0x148] sm:$0xff] %vm2064, %v1951
      %2107 = vst.msk [vmem:[%s280 + $0x150] sm:$0xff] %vm2064, %v1956
      %2108 = vst.msk [vmem:[%s280 + $0x158] sm:$0xff] %vm2064, %v1961
      %2109 = vst.msk [vmem:[%s280 + $0x160] sm:$0xff] %vm2064, %v1966
      %2110 = vst.msk [vmem:[%s280 + $0x168] sm:$0xff] %vm2064, %v1971
      %2111 = vst.msk [vmem:[%s280 + $0x170] sm:$0xff] %vm2064, %v1976
      %2112 = vst.msk [vmem:[%s280 + $0x178] sm:$0xff] %vm2064, %v1981
      %2113 = vst.msk [vmem:[%s280 + $0x180] sm:$0xff] %vm2064, %v1986
      %2114 = vst.msk [vmem:[%s280 + $0x188] sm:$0xff] %vm2064, %v1991
      %2115 = vst.msk [vmem:[%s280 + $0x190] sm:$0xff] %vm2064, %v1996
      %2116 = vst.msk [vmem:[%s280 + $0x198] sm:$0xff] %vm2064, %v2001
      %2117 = vst.msk [vmem:[%s280 + $0x1a0] sm:$0xff] %vm2064, %v2006
      %2118 = vst.msk [vmem:[%s280 + $0x1a8] sm:$0xff] %vm2064, %v2011
      %2119 = vst.msk [vmem:[%s280 + $0x1b0] sm:$0xff] %vm2064, %v2016
      %2120 = vst.msk [vmem:[%s280 + $0x1b8] sm:$0xff] %vm2064, %v2021
      %2121 = vst.msk [vmem:[%s280 + $0x1c0] sm:$0xff] %vm2064, %v2026
      %2122 = vst.msk [vmem:[%s280 + $0x1c8] sm:$0xff] %vm2064, %v2031
      %2123 = vst.msk [vmem:[%s280 + $0x1d0] sm:$0xff] %vm2064, %v2036
      %2124 = vst.msk [vmem:[%s280 + $0x1d8] sm:$0xff] %vm2064, %v2041
      %2125 = vst.msk [vmem:[%s280 + $0x1e0] sm:$0xff] %vm2064, %v2046
      %2126 = vst.msk [vmem:[%s280 + $0x1e8] sm:$0xff] %vm2064, %v2051
      %2127 = vst.msk [vmem:[%s280 + $0x1f0] sm:$0xff] %vm2064, %v2056
      %2128 = vst.msk [vmem:[%s280 + $0x1f8] sm:$0xff] %vm2064, %v2061
      %s2129 = smul.u32 64, %s18
      %p2130 = scmp.lt.s32.totalorder %s2129, 127
      %s2131 = scalar_select %p2130, %s2129, 127
      %s2132 = smul.addr %s2131, 8
      %s2133 = scalar_lea.vmem %s7, %s2132
      // Predicated region
      $region49: #{tpu_custom_call.1} parent=47 // pred_check
        %p2134 = pneg %p188
      $region50: #{tpu_custom_call.1} parent=47 // pred_check_branch
        %2136 = sbr.rel (%p2134) target = $region52
      $region51: #{tpu_custom_call.1} parent=47 // pred_region
        %s2137 = smul.u32 64, %s18
      $region52: #{tpu_custom_call.1} parent=47 // pred_fallthru
        _
    $region48: #{tpu_custom_call.1} parent=5 // pred_fallthru
      _
    %p2138 = scmp.le.s32.totalorder 2, %s13
    // Predicated region
    $region53: #{tpu_custom_call.1} parent=5 // pred_check
      %p2139 = pneg %p2138
    $region54: #{tpu_custom_call.1} parent=5 // pred_check_branch
      %2141 = sbr.rel (%p2139) target = $region56
    $region55: #{tpu_custom_call.1} parent=5 // pred_region
      %s2142 = ssub.s32 %s13, 2
      // Predicated region
      $region57: #{tpu_custom_call.1} parent=55 // pred_check
        %p2143 = pneg %p194
      $region58: #{tpu_custom_call.1} parent=55 // pred_check_branch
        %2145 = sbr.rel (%p2143) target = $region60
      $region59: #{tpu_custom_call.1} parent=55 // pred_region
        %s2146 = smul.u32 64, %s19
        %p2147 = scmp.lt.s32.totalorder %s2146, 127
        %s2148 = scalar_select %p2147, %s2146, 127
        %s2149 = smul.addr %s2148, 8
        %s2150 = scalar_lea.vmem %s7, %s2149
      $region60: #{tpu_custom_call.1} parent=55 // pred_fallthru
        _
    $region56: #{tpu_custom_call.1} parent=5 // pred_fallthru
      _
  $region6: #{tpu_custom_call.1} parent=0 // loop_footer
    %s17 = sadd.s32 1, %s13
  $region7: #{tpu_custom_call.1} parent=0 // loop_footer_branch
    %12 = sbr.rel target = $region3
  $region8: #{tpu_custom_call.1} parent=0 // loop_exit
    _

</llo_original>
